<compile_context>
chip_gen: v7x
topology: tpu7x:2x2x1
jax: 0.10.0
libtpu: 0.0.40
codegen_flags: <defaults>
</compile_context>

<pallas_src>
import math

import jax
import jax.numpy as jnp
from jax import lax
from jax.experimental import pallas as pl
from jax.experimental.pallas import tpu as pltpu


MIN_SIGMA = 0.001
_HALF_LOG_2PI = 0.5 * math.log(2.0 * math.pi)
# Pinned MXU precision: full-f32 passes on the bf16-native MXUs (v6e/v7x).
# lax.Precision.HIGH (bf16_3x) would roughly halve MXU passes and likely still
# hold 1e-4 for these O(1)-magnitude, K=32/64 layers, but HIGHEST is the
# guaranteed-correct choice; re-validate before relaxing it.
_PRECISION = lax.Precision.HIGHEST


def _nn_homo_gaussian_kernel(z_ref, x_ref,
                             w1t_ref, b1_ref,
                             w2t_ref, b2_ref,
                             w3t_ref, b3_ref,
                             inv_sigma_ref, const_ref,
                             out_ref):
    """z_ref: (TB, in_dim); x_ref/out_ref: (TB, out_dim); weights pre-transposed
    to (fan_in, fan_out); biases/constants as (1, fan_out) rows.

    Batch stays on the sublane axis end-to-end: three plain matmuls, no
    in-kernel or wrapper transposes, output written in its native layout."""
    # --- MLP hot path (MXU) ---
    h = jnp.dot(z_ref[...], w1t_ref[...],
                preferred_element_type=jnp.float32, precision=_PRECISION)
    h = jnp.maximum(h + b1_ref[...], 0.0)                      # (TB, h1)

    h = jnp.dot(h, w2t_ref[...],
                preferred_element_type=jnp.float32, precision=_PRECISION)
    h = jnp.maximum(h + b2_ref[...], 0.0)                      # (TB, h2)

    mu = jnp.dot(h, w3t_ref[...],
                 preferred_element_type=jnp.float32, precision=_PRECISION)
    mu = mu + b3_ref[...]                                      # (TB, out_dim)

    # --- HomoGaussian log_prob epilogue (sigma math hoisted to wrapper) ---
    d = (x_ref[...] - mu) * inv_sigma_ref[...]
    out_ref[...] = (-0.5 * d * d + const_ref[...]).astype(out_ref.dtype)


def _round_up(a, m):
    return ((a + m - 1) // m) * m


def nn_homo_gaussian(z, x, params, *, tb_target=2048):
    """z: (batch, in_dim) f32, x: (batch, out_dim) f32.

    params (PyTorch layout): w_l (fan_out, fan_in), b_l (fan_out,),
    log_sigma (out_dim,).  Returns (batch, out_dim) f32 log-probabilities."""
    batch, in_dim = z.shape
    out_dim = x.shape[1]
    h1 = params["w1"].shape[0]
    h2 = params["w2"].shape[0]

    # --- batch tile selection ---
    # Large tiles amortize per-grid-step overhead; when batch > 128 cap the
    # tile so the grid has >= 2 steps (both v7x TensorCores get work under
    # "parallel"); when the whole batch fits one tile, use the exact batch
    # size so the single block equals the full array (no masking at all).
    if batch > 128:
        tb = min(tb_target, _round_up(pl.cdiv(batch, 2), 128))
    else:
        tb = batch
    grid = (pl.cdiv(batch, tb),)

    # --- tiny, one-time parameter prep (negligible HBM: <= ~20 KiB total) ---
    w1t = params["w1"].T                      # (in_dim, h1)
    w2t = params["w2"].T                      # (h1, h2)
    w3t = params["w3"].T                      # (h2, out_dim)
    b1 = params["b1"].reshape(1, h1)
    b2 = params["b2"].reshape(1, h2)
    b3 = params["b3"].reshape(1, out_dim)

    # Hoisted sigma math:
    #   log(sigma) = max(log_sigma, log(min_sigma))   (== clamp(exp(.), min))
    #   1/sigma    = exp(-log(sigma))
    #   const      = -log(sigma) - 0.5*log(2*pi)
    log_sigma_c = jnp.maximum(params["log_sigma"].reshape(1, out_dim),
                              math.log(MIN_SIGMA))
    inv_sigma = jnp.exp(-log_sigma_c)                           # (1, out_dim)
    const = -log_sigma_c - _HALF_LOG_2PI                        # (1, out_dim)

    def _resident(shape):
        # Full-array block, constant index map -> stays VMEM-resident.
        return pl.BlockSpec(shape, lambda i: (0, 0))

    out = pl.pallas_call(
        _nn_homo_gaussian_kernel,
        out_shape=jax.ShapeDtypeStruct((batch, out_dim), jnp.float32),
        grid=grid,
        in_specs=[
            pl.BlockSpec((tb, in_dim), lambda i: (i, 0)),     # z tile (native)
            pl.BlockSpec((tb, out_dim), lambda i: (i, 0)),    # x tile (native)
            _resident((in_dim, h1)), _resident((1, h1)),
            _resident((h1, h2)), _resident((1, h2)),
            _resident((h2, out_dim)), _resident((1, out_dim)),
            _resident((1, out_dim)), _resident((1, out_dim)),
        ],
        out_specs=pl.BlockSpec((tb, out_dim), lambda i: (i, 0)),
        compiler_params=pltpu.CompilerParams(
            dimension_semantics=("parallel",)),
    )(z, x,
      w1t, b1,
      w2t, b2,
      w3t, b3,
      inv_sigma, const)

    return out


def init_params(key, in_dim, out_dim, hidden_dims=(64, 64)):
    """PyTorch nn.Linear default init (U[-1/sqrt(fan_in), 1/sqrt(fan_in)]),
    weights in PyTorch layout (fan_out, fan_in), biases (fan_out,).
    sigma=None in the module -> log_sigma initialized to zeros."""
    dims = (in_dim,) + tuple(hidden_dims) + (out_dim,)
    params = {}
    for layer_idx in range(3):
        fan_in, fan_out = dims[layer_idx], dims[layer_idx + 1]
        key, kw, kb = jax.random.split(key, 3)
        bound = 1.0 / math.sqrt(fan_in)
        params[f"w{layer_idx + 1}"] = jax.random.uniform(
            kw, (fan_out, fan_in), jnp.float32, -bound, bound)
        params[f"b{layer_idx + 1}"] = jax.random.uniform(
            kb, (fan_out,), jnp.float32, -bound, bound)
    params["log_sigma"] = jnp.zeros((out_dim,), jnp.float32)
    return params


def _reference(z, x, params):
    h = jnp.maximum(z @ params["w1"].T + params["b1"], 0.0)
    h = jnp.maximum(h @ params["w2"].T + params["b2"], 0.0)
    mu = h @ params["w3"].T + params["b3"]
    sigma = jnp.maximum(jnp.exp(params["log_sigma"]), MIN_SIGMA)
    return -0.5 * ((x - mu) / sigma) ** 2 - jnp.log(sigma) - _HALF_LOG_2PI


if __name__ == "__main__":
    key = jax.random.PRNGKey(0)
    in_dim, out_dim = 32, 16

    key, kp = jax.random.split(key)
    params = init_params(kp, in_dim, out_dim, hidden_dims=(64, 64))

    # 1) Small-shape check: single exact full-array block.
    batch = 8
    key, kz, kx = jax.random.split(key, 3)
    z = jax.random.normal(kz, (batch, in_dim), jnp.float32)
    x = jax.random.normal(kx, (batch, out_dim), jnp.float32)

    out = nn_homo_gaussian(z, x, params)
    jax.block_until_ready(out)
    ref = _reference(z, x, params)
    assert out.shape == (batch, out_dim)
    assert jnp.allclose(out, ref, atol=1e-4, rtol=1e-4), "mismatch (small)"

    # 2) Multi-step grid with a ragged (masked) last block: batch=300 ->
    #    tb=256, grid=(2,), last block covers only 44 valid rows.
    batch2 = 300
    key, kz2, kx2 = jax.random.split(key, 3)
    z2 = jax.random.normal(kz2, (batch2, in_dim), jnp.float32)
    x2 = jax.random.normal(kx2, (batch2, out_dim), jnp.float32)

    out2 = nn_homo_gaussian(z2, x2, params)
    jax.block_until_ready(out2)
    ref2 = _reference(z2, x2, params)
    assert out2.shape == (batch2, out_dim)
    assert jnp.allclose(out2, ref2, atol=1e-4, rtol=1e-4), "mismatch (ragged)"

    # 3) Exact multi-step split (both v7x TensorCores busy): batch=1024 ->
    #    tb=512, grid=(2,).
    batch3 = 1024
    key, kz3, kx3 = jax.random.split(key, 3)
    z3 = jax.random.normal(kz3, (batch3, in_dim), jnp.float32)
    x3 = jax.random.normal(kx3, (batch3, out_dim), jnp.float32)

    out3 = nn_homo_gaussian(z3, x3, params)
    jax.block_until_ready(out3)
    ref3 = _reference(z3, x3, params)
    assert out3.shape == (batch3, out_dim)
    assert jnp.allclose(out3, ref3, atol=1e-4, rtol=1e-4), "mismatch (2-step)"

    print("KERNEL_OK")
</pallas_src>

<mosaic_0001>
module attributes {stable_mosaic.version = 11 : i64} {
  func.func @_nn_homo_gaussian_kernel(%arg0: i32, %arg1: memref<8x32xf32, #tpu.memory_space<vmem>>, %arg2: memref<8x16xf32, #tpu.memory_space<vmem>>, %arg3: memref<32x64xf32, #tpu.memory_space<vmem>>, %arg4: memref<1x64xf32, #tpu.memory_space<vmem>>, %arg5: memref<64x64xf32, #tpu.memory_space<vmem>>, %arg6: memref<1x64xf32, #tpu.memory_space<vmem>>, %arg7: memref<64x16xf32, #tpu.memory_space<vmem>>, %arg8: memref<1x16xf32, #tpu.memory_space<vmem>>, %arg9: memref<1x16xf32, #tpu.memory_space<vmem>>, %arg10: memref<1x16xf32, #tpu.memory_space<vmem>>, %arg11: memref<8x16xf32, #tpu.memory_space<vmem>>) attributes {dimension_semantics = [#tpu.dimension_semantics<parallel>], iteration_bounds = array<i64: 1>, scalar_prefetch = 0 : i64, scratch_operands = 0 : i64, tpu.core_type = #tpu.core_type<tc>, window_params = [{transform_indices = @transform_0, window_bounds = array<i64: 8, 32>}, {transform_indices = @transform_1, window_bounds = array<i64: 8, 16>}, {pipeline_mode = #tpu.pipeline_mode<synchronous>, transform_indices = @transform_2, window_bounds = array<i64: 32, 64>}, {pipeline_mode = #tpu.pipeline_mode<synchronous>, transform_indices = @transform_3, window_bounds = array<i64: 1, 64>}, {pipeline_mode = #tpu.pipeline_mode<synchronous>, transform_indices = @transform_4, window_bounds = array<i64: 64, 64>}, {pipeline_mode = #tpu.pipeline_mode<synchronous>, transform_indices = @transform_5, window_bounds = array<i64: 1, 64>}, {pipeline_mode = #tpu.pipeline_mode<synchronous>, transform_indices = @transform_6, window_bounds = array<i64: 64, 16>}, {pipeline_mode = #tpu.pipeline_mode<synchronous>, transform_indices = @transform_7, window_bounds = array<i64: 1, 16>}, {pipeline_mode = #tpu.pipeline_mode<synchronous>, transform_indices = @transform_8, window_bounds = array<i64: 1, 16>}, {pipeline_mode = #tpu.pipeline_mode<synchronous>, transform_indices = @transform_9, window_bounds = array<i64: 1, 16>}, {transform_indices = @transform_10, window_bounds = array<i64: 8, 16>}]} {
    %c0 = arith.constant 0 : index
    %c0_0 = arith.constant 0 : index
    %0 = vector.load %arg1[%c0, %c0_0] : memref<8x32xf32, #tpu.memory_space<vmem>>, vector<8x32xf32>
    %c0_1 = arith.constant 0 : index
    %c0_2 = arith.constant 0 : index
    %1 = vector.load %arg3[%c0_1, %c0_2] : memref<32x64xf32, #tpu.memory_space<vmem>>, vector<32x64xf32>
    %cst = arith.constant dense<0.000000e+00> : vector<8x64xf32>
    %2 = tpu.matmul %0, %1, %cst {dimension_numbers = #tpu.dot_dimension_numbers<[1], [0], [0], [1], [0, 0, 1, 1], [], []>, precision = #tpu.contract_precision<fp32>} : vector<8x32xf32>, vector<32x64xf32>, vector<8x64xf32> -> vector<8x64xf32>
    %c0_3 = arith.constant 0 : index
    %c0_4 = arith.constant 0 : index
    %3 = vector.load %arg4[%c0_3, %c0_4] : memref<1x64xf32, #tpu.memory_space<vmem>>, vector<1x64xf32>
    %4 = vector.broadcast %3 : vector<1x64xf32> to vector<8x64xf32>
    %5 = arith.addf %2, %4 : vector<8x64xf32>
    %cst_5 = arith.constant 0.000000e+00 : f32
    %6 = vector.broadcast %cst_5 : f32 to vector<8x64xf32>
    %7 = arith.maximumf %5, %6 : vector<8x64xf32>
    %c0_6 = arith.constant 0 : index
    %c0_7 = arith.constant 0 : index
    %8 = vector.load %arg5[%c0_6, %c0_7] : memref<64x64xf32, #tpu.memory_space<vmem>>, vector<64x64xf32>
    %cst_8 = arith.constant dense<0.000000e+00> : vector<8x64xf32>
    %9 = tpu.matmul %7, %8, %cst_8 {dimension_numbers = #tpu.dot_dimension_numbers<[1], [0], [0], [1], [0, 0, 1, 1], [], []>, precision = #tpu.contract_precision<fp32>} : vector<8x64xf32>, vector<64x64xf32>, vector<8x64xf32> -> vector<8x64xf32>
    %c0_9 = arith.constant 0 : index
    %c0_10 = arith.constant 0 : index
    %10 = vector.load %arg6[%c0_9, %c0_10] : memref<1x64xf32, #tpu.memory_space<vmem>>, vector<1x64xf32>
    %11 = vector.broadcast %10 : vector<1x64xf32> to vector<8x64xf32>
    %12 = arith.addf %9, %11 : vector<8x64xf32>
    %cst_11 = arith.constant 0.000000e+00 : f32
    %13 = vector.broadcast %cst_11 : f32 to vector<8x64xf32>
    %14 = arith.maximumf %12, %13 : vector<8x64xf32>
    %c0_12 = arith.constant 0 : index
    %c0_13 = arith.constant 0 : index
    %15 = vector.load %arg7[%c0_12, %c0_13] : memref<64x16xf32, #tpu.memory_space<vmem>>, vector<64x16xf32>
    %cst_14 = arith.constant dense<0.000000e+00> : vector<8x16xf32>
    %16 = tpu.matmul %14, %15, %cst_14 {dimension_numbers = #tpu.dot_dimension_numbers<[1], [0], [0], [1], [0, 0, 1, 1], [], []>, precision = #tpu.contract_precision<fp32>} : vector<8x64xf32>, vector<64x16xf32>, vector<8x16xf32> -> vector<8x16xf32>
    %c0_15 = arith.constant 0 : index
    %c0_16 = arith.constant 0 : index
    %17 = vector.load %arg8[%c0_15, %c0_16] : memref<1x16xf32, #tpu.memory_space<vmem>>, vector<1x16xf32>
    %18 = vector.broadcast %17 : vector<1x16xf32> to vector<8x16xf32>
    %19 = arith.addf %16, %18 : vector<8x16xf32>
    %c0_17 = arith.constant 0 : index
    %c0_18 = arith.constant 0 : index
    %20 = vector.load %arg2[%c0_17, %c0_18] : memref<8x16xf32, #tpu.memory_space<vmem>>, vector<8x16xf32>
    %21 = arith.subf %20, %19 : vector<8x16xf32>
    %c0_19 = arith.constant 0 : index
    %c0_20 = arith.constant 0 : index
    %22 = vector.load %arg9[%c0_19, %c0_20] : memref<1x16xf32, #tpu.memory_space<vmem>>, vector<1x16xf32>
    %23 = vector.broadcast %22 : vector<1x16xf32> to vector<8x16xf32>
    %24 = arith.mulf %21, %23 : vector<8x16xf32>
    %cst_21 = arith.constant -5.000000e-01 : f32
    %25 = vector.broadcast %cst_21 : f32 to vector<8x16xf32>
    %26 = arith.mulf %25, %24 : vector<8x16xf32>
    %27 = arith.mulf %26, %24 : vector<8x16xf32>
    %c0_22 = arith.constant 0 : index
    %c0_23 = arith.constant 0 : index
    %28 = vector.load %arg10[%c0_22, %c0_23] : memref<1x16xf32, #tpu.memory_space<vmem>>, vector<1x16xf32>
    %29 = vector.broadcast %28 : vector<1x16xf32> to vector<8x16xf32>
    %30 = arith.addf %27, %29 : vector<8x16xf32>
    %c0_24 = arith.constant 0 : index
    %c0_25 = arith.constant 0 : index
    %31 = vector.load %arg11[%c0_24, %c0_25] : memref<8x16xf32, #tpu.memory_space<vmem>>, vector<8x16xf32>
    tpu.vector_store %arg11[%c0_24, %c0_25], %30 {strides = array<i32>} : memref<8x16xf32, #tpu.memory_space<vmem>>, vector<8x16xf32>,
    return
  }
  func.func @transform_0(%arg0: i32) -> (i32, i32) {
    %c0_i32 = arith.constant 0 : i32
    %c0_i32_0 = arith.constant 0 : i32
    return %arg0, %c0_i32 : i32, i32
  }
  func.func @transform_1(%arg0: i32) -> (i32, i32) {
    %c0_i32 = arith.constant 0 : i32
    %c0_i32_0 = arith.constant 0 : i32
    return %arg0, %c0_i32 : i32, i32
  }
  func.func @transform_2(%arg0: i32) -> (i32, i32) {
    %c0_i32 = arith.constant 0 : i32
    %c0_i32_0 = arith.constant 0 : i32
    %c0_i32_1 = arith.constant 0 : i32
    return %c0_i32, %c0_i32_0 : i32, i32
  }
  func.func @transform_3(%arg0: i32) -> (i32, i32) {
    %c0_i32 = arith.constant 0 : i32
    %c0_i32_0 = arith.constant 0 : i32
    %c0_i32_1 = arith.constant 0 : i32
    return %c0_i32, %c0_i32_0 : i32, i32
  }
  func.func @transform_4(%arg0: i32) -> (i32, i32) {
    %c0_i32 = arith.constant 0 : i32
    %c0_i32_0 = arith.constant 0 : i32
    %c0_i32_1 = arith.constant 0 : i32
    return %c0_i32, %c0_i32_0 : i32, i32
  }
  func.func @transform_5(%arg0: i32) -> (i32, i32) {
    %c0_i32 = arith.constant 0 : i32
    %c0_i32_0 = arith.constant 0 : i32
    %c0_i32_1 = arith.constant 0 : i32
    return %c0_i32, %c0_i32_0 : i32, i32
  }
  func.func @transform_6(%arg0: i32) -> (i32, i32) {
    %c0_i32 = arith.constant 0 : i32
    %c0_i32_0 = arith.constant 0 : i32
    %c0_i32_1 = arith.constant 0 : i32
    return %c0_i32, %c0_i32_0 : i32, i32
  }
  func.func @transform_7(%arg0: i32) -> (i32, i32) {
    %c0_i32 = arith.constant 0 : i32
    %c0_i32_0 = arith.constant 0 : i32
    %c0_i32_1 = arith.constant 0 : i32
    return %c0_i32, %c0_i32_0 : i32, i32
  }
  func.func @transform_8(%arg0: i32) -> (i32, i32) {
    %c0_i32 = arith.constant 0 : i32
    %c0_i32_0 = arith.constant 0 : i32
    %c0_i32_1 = arith.constant 0 : i32
    return %c0_i32, %c0_i32_0 : i32, i32
  }
  func.func @transform_9(%arg0: i32) -> (i32, i32) {
    %c0_i32 = arith.constant 0 : i32
    %c0_i32_0 = arith.constant 0 : i32
    %c0_i32_1 = arith.constant 0 : i32
    return %c0_i32, %c0_i32_0 : i32, i32
  }
  func.func @transform_10(%arg0: i32) -> (i32, i32) {
    %c0_i32 = arith.constant 0 : i32
    %c0_i32_0 = arith.constant 0 : i32
    return %arg0, %c0_i32 : i32, i32
  }
}

</mosaic_0001>

<llo_original>
// kernel: tpu_custom_call.1
$region0: #{tpu_custom_call.1}
  #allocation0 [shape = 'u32[]', space=smem, size = 0x4, offset = 0x4, fixed_abs, tag = 'smem constant byte address 0x4 - core index']
  #allocation1 [shape = 'u32[144,128]{1,0:T(1,128)}', space=vmem, size = 0x12000, scoped, tag = 'internal scratch']
  %s0 = inlined_call_operand.vmem [shape: f32[8,32], index: 0, kind: input, shape index: {}]
  %s1 = inlined_call_operand.vmem [shape: f32[8,16], index: 1, kind: input, shape index: {}]
  %s2 = inlined_call_operand.hbm [shape: f32[32,64], index: 2, kind: input, shape index: {}]
  %s3 = inlined_call_operand.vmem [shape: f32[1,64], index: 3, kind: input, shape index: {}]
  %s4 = inlined_call_operand.vmem [shape: f32[64,64], index: 4, kind: input, shape index: {}]
  %s5 = inlined_call_operand.vmem [shape: f32[1,64], index: 5, kind: input, shape index: {}]
  %s6 = inlined_call_operand.vmem [shape: f32[64,16], index: 6, kind: input, shape index: {}]
  %s7 = inlined_call_operand.vmem [shape: f32[1,16], index: 7, kind: input, shape index: {}]
  %s8 = inlined_call_operand.vmem [shape: f32[1,16], index: 8, kind: input, shape index: {}]
  %s9 = inlined_call_operand.vmem [shape: f32[1,16], index: 9, kind: input, shape index: {}]
  %s10 = inlined_call_operand.hbm [shape: f32[8,16], index: 10, kind: output, shape index: {}]
  %s11 = sld [smem:[#allocation0]]
  $region54: #{tpu_custom_call.1} parent=0
    _
  %s13 = ssub.s32 1, %s11
  %s14 = scalar_select 0, %s13, %s11
  $region1: #{tpu_custom_call.1} parent=0
    #allocation2 [shape = 'u8[16384]{0}', space=vmem, size = 0x4000, scoped, tag = 'input window, operand 2, single buffered']
    #allocation3 [shape = 's32[1]{0}', space=sflag, size = 0x4, scoped, tag = 'scoped memory for tpu_custom_call.1']
    #allocation4 [shape = 's32[1]{0}', space=sflag, size = 0x4, scoped, tag = 'scoped memory for tpu_custom_call.1']
    #allocation5 [shape = 'u8[4096]{0}', space=vmem, size = 0x1000, scoped, tag = 'output window, operand 0, single buffered']
    %15 = vsyncpa [#allocation3], 0
    %16 = vsyncpa [#allocation4], 0
    // Predicated region
    $region2: #{tpu_custom_call.1} parent=1 // pred_check
      _
    $region3: #{tpu_custom_call.1} parent=1 // pred_check_branch
      %18 = sbr.rel (0) target = $region5
    $region4: #{tpu_custom_call.1} parent=1 // pred_region
      _
    $region5: #{tpu_custom_call.1} parent=1 // pred_fallthru
      _
    // Predicated region
    $region6: #{tpu_custom_call.1} parent=1 // pred_check
      _
    $region7: #{tpu_custom_call.1} parent=1 // pred_check_branch
      %20 = sbr.rel (0) target = $region9
    $region8: #{tpu_custom_call.1} parent=1 // pred_region
      _
    $region9: #{tpu_custom_call.1} parent=1 // pred_fallthru
      _
    // Predicated region
    $region10: #{tpu_custom_call.1} parent=1 // pred_check
      _
    $region11: #{tpu_custom_call.1} parent=1 // pred_check_branch
      %22 = sbr.rel (0) target = $region13
    $region12: #{tpu_custom_call.1} parent=1 // pred_region
      %s24 = ssub.s32 512, 512
      %25 = vsyncadd [#allocation3], %s24
      %s26 = sshll.u32 [#allocation2], 4
      %s27 = int_to_ptr.vmem [resolvable:$true] %s26
      %32 = dma.hbm_to_vmem [thread:$0]  %s2, 512, %s27, [#allocation3], 128, 128, 8
    $region13: #{tpu_custom_call.1} parent=1 // pred_fallthru
      _
    // Predicated region
    $region14: #{tpu_custom_call.1} parent=1 // pred_check
      _
    $region15: #{tpu_custom_call.1} parent=1 // pred_check_branch
      %34 = sbr.rel (0) target = $region17
    $region16: #{tpu_custom_call.1} parent=1 // pred_region
      _
    $region17: #{tpu_custom_call.1} parent=1 // pred_fallthru
      _
    // Predicated region
    $region18: #{tpu_custom_call.1} parent=1 // pred_check
      _
    $region19: #{tpu_custom_call.1} parent=1 // pred_check_branch
      %36 = sbr.rel (0) target = $region21
    $region20: #{tpu_custom_call.1} parent=1 // pred_region
      _
    $region21: #{tpu_custom_call.1} parent=1 // pred_fallthru
      _
    // Predicated region
    $region22: #{tpu_custom_call.1} parent=1 // pred_check
      _
    $region23: #{tpu_custom_call.1} parent=1 // pred_check_branch
      %38 = sbr.rel (0) target = $region25
    $region24: #{tpu_custom_call.1} parent=1 // pred_region
      _
    $region25: #{tpu_custom_call.1} parent=1 // pred_fallthru
      _
    // Predicated region
    $region26: #{tpu_custom_call.1} parent=1 // pred_check
      _
    $region27: #{tpu_custom_call.1} parent=1 // pred_check_branch
      %40 = sbr.rel (0) target = $region29
    $region28: #{tpu_custom_call.1} parent=1 // pred_region
      _
    $region29: #{tpu_custom_call.1} parent=1 // pred_fallthru
      _
    // Predicated region
    $region30: #{tpu_custom_call.1} parent=1 // pred_check
      _
    $region31: #{tpu_custom_call.1} parent=1 // pred_check_branch
      %42 = sbr.rel (0) target = $region33
    $region32: #{tpu_custom_call.1} parent=1 // pred_region
      _
    $region33: #{tpu_custom_call.1} parent=1 // pred_fallthru
      _
    // Predicated region
    $region34: #{tpu_custom_call.1} parent=1 // pred_check
      _
    $region35: #{tpu_custom_call.1} parent=1 // pred_check_branch
      %44 = sbr.rel (0) target = $region37
    $region36: #{tpu_custom_call.1} parent=1 // pred_region
      _
    $region37: #{tpu_custom_call.1} parent=1 // pred_fallthru
      _
    // Predicated region
    $region38: #{tpu_custom_call.1} parent=1 // pred_check
      _
    $region39: #{tpu_custom_call.1} parent=1 // pred_check_branch
      %46 = sbr.rel (0) target = $region41
    $region40: #{tpu_custom_call.1} parent=1 // pred_region
      _
    $region41: #{tpu_custom_call.1} parent=1 // pred_fallthru
      _
    // Predicated region
    $region42: #{tpu_custom_call.1} parent=1 // pred_check
      _
    $region43: #{tpu_custom_call.1} parent=1 // pred_check_branch
      %48 = sbr.rel (0) target = $region45
    $region44: #{tpu_custom_call.1} parent=1 // pred_region
      %49 = dma.done [#allocation3], 512
    $region45: #{tpu_custom_call.1} parent=1 // pred_fallthru
      _
    %v50 = vld [vmem:[%s0] sm:$0xff]
    %v51 = vld [vmem:[#allocation2] sm:$0xff]
    %v52 = vld [vmem:[#allocation2 + $0x8] sm:$0xff]
    %v53 = vld [vmem:[#allocation2 + $0x10] sm:$0xff]
    %v54 = vld [vmem:[#allocation2 + $0x18] sm:$0xff]
    %v55 = vld [vmem:[%s3] sm:$0x1]
    %v57 = vlaneseq
    %v58 = vshrl.u32 %v57, 7
    %v59 = vsub.s32 0, %v58
    %v60 = vrot.slane %v55, %v59
    %vm62 = vcmask 261120
    %v64 = vsel %vm62, %v50, 0
    %66 = vmatprep.subr.mxu0 0.0
    %v67 = vand.u32 %v51, 4294901760
    %68 = vmatpush1.msra.mxu0 %v67
    %69 = vmatprep.subr.mxu0 0.0
    %v70 = vand.u32 %v52, 4294901760
    %71 = vmatpush1.msra.mxu0 %v70
    %72 = vmatprep.subr.mxu0 0.0
    %v73 = vand.u32 %v53, 4294901760
    %74 = vmatpush1.msra.mxu0 %v73
    %75 = vmatprep.subr.mxu0 0.0
    %v76 = vand.u32 %v54, 4294901760
    %77 = vmatpush1.msra.mxu0 %v76
    %78 = vmatprep.subr.mxu0 0.0
    %79 = vmatpush1.msra.mxu0 0.0
    %80 = vmatprep.subr.mxu0 0.0
    %81 = vmatpush1.msra.mxu0 0.0
    %82 = vmatprep.subr.mxu0 0.0
    %83 = vmatpush1.msra.mxu0 0.0
    %84 = vmatprep.subr.mxu0 0.0
    %85 = vmatpush1.msra.mxu0 0.0
    %86 = vmatprep.subr.mxu0 0.0
    %87 = vmatpush1.msra.mxu0 0.0
    %88 = vmatprep.subr.mxu0 0.0
    %89 = vmatpush1.msra.mxu0 0.0
    %90 = vmatprep.subr.mxu0 0.0
    %91 = vmatpush1.msra.mxu0 0.0
    %92 = vmatprep.subr.mxu0 0.0
    %93 = vmatpush1.msra.mxu0 0.0
    %94 = vmatprep.subr.mxu0 0.0
    %95 = vmatpush1.msra.mxu0 0.0
    %96 = vmatprep.subr.mxu0 0.0
    %97 = vmatpush1.msra.mxu0 0.0
    %98 = vmatprep.subr.mxu0 0.0
    %99 = vmatpush1.msra.mxu0 0.0
    %100 = vmatprep.subr.mxu0 0.0
    %101 = vmatpush1.msra.mxu0 0.0
    %102 = vmatprep.subr.mxu0 0.0
    %103 = vmatpush1.msra.mxu0 0.0
    %104 = vmatprep.subr.mxu0 0.0
    %105 = vmatpush1.msra.mxu0 0.0
    %106 = vmatprep.subr.mxu0 0.0
    %107 = vmatpush1.msra.mxu0 0.0
    %108 = vmatprep.subr.mxu0 0.0
    %109 = vmatpush1.msra.mxu0 0.0
    %110 = vmatprep.subr.mxu0 0.0
    %111 = vmatpush1.msra.mxu0 0.0
    %112 = vmatprep.subr.mxu0 0.0
    %113 = vmatpush1.msra.mxu0 0.0
    %114 = vmatprep.subr.mxu0 0.0
    %115 = vmatpush1.msra.mxu0 0.0
    %116 = vmatprep.subr.mxu0 0.0
    %117 = vmatpush1.msra.mxu0 0.0
    %118 = vmatprep.subr.mxu0 0.0
    %119 = vmatpush1.msra.mxu0 0.0
    %120 = vmatprep.subr.mxu0 0.0
    %121 = vmatpush1.msra.mxu0 0.0
    %122 = vmatprep.subr.mxu0 0.0
    %123 = vmatpush1.msra.mxu0 0.0
    %124 = vmatprep.subr.mxu0 0.0
    %125 = vmatpush1.msra.mxu0 0.0
    %126 = vmatprep.subr.mxu0 0.0
    %127 = vmatpush1.msra.mxu0 0.0
    %128 = vmatprep.subr.mxu0 0.0
    %129 = vmatpush1.msra.mxu0 0.0
    %130 = vmatprep.subr.mxu0 0.0
    %131 = vmatpush1.msra.mxu0 0.0
    %132 = vmatprep.subr.mxu0 0.0
    %133 = vmatpush1.msra.mxu0 0.0
    %134 = vmatprep.mubr.f32.mxu0 0.0
    %v135 = vand.u32 %v64, 4294901760
    %v136 = vsub.f32 %v64, %v135
    %v137 = vand.u32 %v136, 4294901760
    %v138 = vsub.f32 %v136, %v137
    %v139 = vand.u32 %v138, 4294901760
    %140 = vmatmul.mubr.f32.gmra.mrb[0].mxu0 %v139
    %v141 = vpop.f32.mrb[0].mxu0
    %v142 = vadd.f32 %v60, %v141
    %v143 = vpop.f32.mrb[0].mxu0
    %144 = vdwg.mxu0
    %145 = vmatprep.subr.mxu0 0.0
    %v146 = vand.u32 %v51, 4294901760
    %v147 = vsub.f32 %v51, %v146
    %v148 = vand.u32 %v147, 4294901760
    %v149 = vsub.f32 %v147, %v148
    %v150 = vand.u32 %v149, 4294901760
    %151 = vmatpush1.msra.mxu0 %v150
    %152 = vmatprep.subr.mxu0 0.0
    %v153 = vand.u32 %v52, 4294901760
    %v154 = vsub.f32 %v52, %v153
    %v155 = vand.u32 %v154, 4294901760
    %v156 = vsub.f32 %v154, %v155
    %v157 = vand.u32 %v156, 4294901760
    %158 = vmatpush1.msra.mxu0 %v157
    %159 = vmatprep.subr.mxu0 0.0
    %v160 = vand.u32 %v53, 4294901760
    %v161 = vsub.f32 %v53, %v160
    %v162 = vand.u32 %v161, 4294901760
    %v163 = vsub.f32 %v161, %v162
    %v164 = vand.u32 %v163, 4294901760
    %165 = vmatpush1.msra.mxu0 %v164
    %166 = vmatprep.subr.mxu0 0.0
    %v167 = vand.u32 %v54, 4294901760
    %v168 = vsub.f32 %v54, %v167
    %v169 = vand.u32 %v168, 4294901760
    %v170 = vsub.f32 %v168, %v169
    %v171 = vand.u32 %v170, 4294901760
    %172 = vmatpush1.msra.mxu0 %v171
    %173 = vmatprep.subr.mxu0 0.0
    %174 = vmatpush1.msra.mxu0 0.0
    %175 = vmatprep.subr.mxu0 0.0
    %176 = vmatpush1.msra.mxu0 0.0
    %177 = vmatprep.subr.mxu0 0.0
    %178 = vmatpush1.msra.mxu0 0.0
    %179 = vmatprep.subr.mxu0 0.0
    %180 = vmatpush1.msra.mxu0 0.0
    %181 = vmatprep.subr.mxu0 0.0
    %182 = vmatpush1.msra.mxu0 0.0
    %183 = vmatprep.subr.mxu0 0.0
    %184 = vmatpush1.msra.mxu0 0.0
    %185 = vmatprep.subr.mxu0 0.0
    %186 = vmatpush1.msra.mxu0 0.0
    %187 = vmatprep.subr.mxu0 0.0
    %188 = vmatpush1.msra.mxu0 0.0
    %189 = vmatprep.subr.mxu0 0.0
    %190 = vmatpush1.msra.mxu0 0.0
    %191 = vmatprep.subr.mxu0 0.0
    %192 = vmatpush1.msra.mxu0 0.0
    %193 = vmatprep.subr.mxu0 0.0
    %194 = vmatpush1.msra.mxu0 0.0
    %195 = vmatprep.subr.mxu0 0.0
    %196 = vmatpush1.msra.mxu0 0.0
    %197 = vmatprep.subr.mxu0 0.0
    %198 = vmatpush1.msra.mxu0 0.0
    %199 = vmatprep.subr.mxu0 0.0
    %200 = vmatpush1.msra.mxu0 0.0
    %201 = vmatprep.subr.mxu0 0.0
    %202 = vmatpush1.msra.mxu0 0.0
    %203 = vmatprep.subr.mxu0 0.0
    %204 = vmatpush1.msra.mxu0 0.0
    %205 = vmatprep.subr.mxu0 0.0
    %206 = vmatpush1.msra.mxu0 0.0
    %207 = vmatprep.subr.mxu0 0.0
    %208 = vmatpush1.msra.mxu0 0.0
    %209 = vmatprep.subr.mxu0 0.0
    %210 = vmatpush1.msra.mxu0 0.0
    %211 = vmatprep.subr.mxu0 0.0
    %212 = vmatpush1.msra.mxu0 0.0
    %213 = vmatprep.subr.mxu0 0.0
    %214 = vmatpush1.msra.mxu0 0.0
    %215 = vmatprep.subr.mxu0 0.0
    %216 = vmatpush1.msra.mxu0 0.0
    %217 = vmatprep.subr.mxu0 0.0
    %218 = vmatpush1.msra.mxu0 0.0
    %219 = vmatprep.subr.mxu0 0.0
    %220 = vmatpush1.msra.mxu0 0.0
    %221 = vmatprep.subr.mxu0 0.0
    %222 = vmatpush1.msra.mxu0 0.0
    %223 = vmatprep.subr.mxu0 0.0
    %224 = vmatpush1.msra.mxu0 0.0
    %225 = vmatprep.subr.mxu0 0.0
    %226 = vmatpush1.msra.mxu0 0.0
    %227 = vmatprep.subr.mxu0 0.0
    %228 = vmatpush1.msra.mxu0 0.0
    %229 = vmatprep.mubr.f32.mxu0 0.0
    %v230 = vand.u32 %v64, 4294901760
    %231 = vmatmul.mubr.f32.gmra.mrb[0].mxu0 %v230
    %v232 = vpop.f32.mrb[0].mxu0
    %v233 = vadd.f32 %v142, %v232
    %v234 = vpop.f32.mrb[0].mxu0
    %235 = vdwg.mxu0
    %236 = vmatprep.subr.mxu0 0.0
    %v237 = vand.u32 %v51, 4294901760
    %v238 = vsub.f32 %v51, %v237
    %239 = vmatpush1.msra.mxu0 %v238
    %240 = vmatprep.subr.mxu0 0.0
    %v241 = vand.u32 %v52, 4294901760
    %v242 = vsub.f32 %v52, %v241
    %243 = vmatpush1.msra.mxu0 %v242
    %244 = vmatprep.subr.mxu0 0.0
    %v245 = vand.u32 %v53, 4294901760
    %v246 = vsub.f32 %v53, %v245
    %247 = vmatpush1.msra.mxu0 %v246
    %248 = vmatprep.subr.mxu0 0.0
    %v249 = vand.u32 %v54, 4294901760
    %v250 = vsub.f32 %v54, %v249
    %251 = vmatpush1.msra.mxu0 %v250
    %252 = vmatprep.subr.mxu0 0.0
    %253 = vmatpush1.msra.mxu0 0.0
    %254 = vmatprep.subr.mxu0 0.0
    %255 = vmatpush1.msra.mxu0 0.0
    %256 = vmatprep.subr.mxu0 0.0
    %257 = vmatpush1.msra.mxu0 0.0
    %258 = vmatprep.subr.mxu0 0.0
    %259 = vmatpush1.msra.mxu0 0.0
    %260 = vmatprep.subr.mxu0 0.0
    %261 = vmatpush1.msra.mxu0 0.0
    %262 = vmatprep.subr.mxu0 0.0
    %263 = vmatpush1.msra.mxu0 0.0
    %264 = vmatprep.subr.mxu0 0.0
    %265 = vmatpush1.msra.mxu0 0.0
    %266 = vmatprep.subr.mxu0 0.0
    %267 = vmatpush1.msra.mxu0 0.0
    %268 = vmatprep.subr.mxu0 0.0
    %269 = vmatpush1.msra.mxu0 0.0
    %270 = vmatprep.subr.mxu0 0.0
    %271 = vmatpush1.msra.mxu0 0.0
    %272 = vmatprep.subr.mxu0 0.0
    %273 = vmatpush1.msra.mxu0 0.0
    %274 = vmatprep.subr.mxu0 0.0
    %275 = vmatpush1.msra.mxu0 0.0
    %276 = vmatprep.subr.mxu0 0.0
    %277 = vmatpush1.msra.mxu0 0.0
    %278 = vmatprep.subr.mxu0 0.0
    %279 = vmatpush1.msra.mxu0 0.0
    %280 = vmatprep.subr.mxu0 0.0
    %281 = vmatpush1.msra.mxu0 0.0
    %282 = vmatprep.subr.mxu0 0.0
    %283 = vmatpush1.msra.mxu0 0.0
    %284 = vmatprep.subr.mxu0 0.0
    %285 = vmatpush1.msra.mxu0 0.0
    %286 = vmatprep.subr.mxu0 0.0
    %287 = vmatpush1.msra.mxu0 0.0
    %288 = vmatprep.subr.mxu0 0.0
    %289 = vmatpush1.msra.mxu0 0.0
    %290 = vmatprep.subr.mxu0 0.0
    %291 = vmatpush1.msra.mxu0 0.0
    %292 = vmatprep.subr.mxu0 0.0
    %293 = vmatpush1.msra.mxu0 0.0
    %294 = vmatprep.subr.mxu0 0.0
    %295 = vmatpush1.msra.mxu0 0.0
    %296 = vmatprep.subr.mxu0 0.0
    %297 = vmatpush1.msra.mxu0 0.0
    %298 = vmatprep.subr.mxu0 0.0
    %299 = vmatpush1.msra.mxu0 0.0
    %300 = vmatprep.subr.mxu0 0.0
    %301 = vmatpush1.msra.mxu0 0.0
    %302 = vmatprep.subr.mxu0 0.0
    %303 = vmatpush1.msra.mxu0 0.0
    %304 = vmatprep.subr.mxu0 0.0
    %305 = vmatpush1.msra.mxu0 0.0
    %306 = vmatprep.subr.mxu0 0.0
    %307 = vmatpush1.msra.mxu0 0.0
    %308 = vmatprep.mubr.f32.mxu0 0.0
    %v309 = vand.u32 %v64, 4294901760
    %v310 = vsub.f32 %v64, %v309
    %311 = vmatmul.mubr.f32.gmra.mrb[0].mxu0 %v310
    %v312 = vpop.f32.mrb[0].mxu0
    %v313 = vadd.f32 %v233, %v312
    %v314 = vpop.f32.mrb[0].mxu0
    %315 = vdwg.mxu0
    %316 = vmatprep.subr.mxu0 0.0
    %v317 = vand.u32 %v51, 4294901760
    %318 = vmatpush1.msra.mxu0 %v317
    %319 = vmatprep.subr.mxu0 0.0
    %v320 = vand.u32 %v52, 4294901760
    %321 = vmatpush1.msra.mxu0 %v320
    %322 = vmatprep.subr.mxu0 0.0
    %v323 = vand.u32 %v53, 4294901760
    %324 = vmatpush1.msra.mxu0 %v323
    %325 = vmatprep.subr.mxu0 0.0
    %v326 = vand.u32 %v54, 4294901760
    %327 = vmatpush1.msra.mxu0 %v326
    %328 = vmatprep.subr.mxu0 0.0
    %329 = vmatpush1.msra.mxu0 0.0
    %330 = vmatprep.subr.mxu0 0.0
    %331 = vmatpush1.msra.mxu0 0.0
    %332 = vmatprep.subr.mxu0 0.0
    %333 = vmatpush1.msra.mxu0 0.0
    %334 = vmatprep.subr.mxu0 0.0
    %335 = vmatpush1.msra.mxu0 0.0
    %336 = vmatprep.subr.mxu0 0.0
    %337 = vmatpush1.msra.mxu0 0.0
    %338 = vmatprep.subr.mxu0 0.0
    %339 = vmatpush1.msra.mxu0 0.0
    %340 = vmatprep.subr.mxu0 0.0
    %341 = vmatpush1.msra.mxu0 0.0
    %342 = vmatprep.subr.mxu0 0.0
    %343 = vmatpush1.msra.mxu0 0.0
    %344 = vmatprep.subr.mxu0 0.0
    %345 = vmatpush1.msra.mxu0 0.0
    %346 = vmatprep.subr.mxu0 0.0
    %347 = vmatpush1.msra.mxu0 0.0
    %348 = vmatprep.subr.mxu0 0.0
    %349 = vmatpush1.msra.mxu0 0.0
    %350 = vmatprep.subr.mxu0 0.0
    %351 = vmatpush1.msra.mxu0 0.0
    %352 = vmatprep.subr.mxu0 0.0
    %353 = vmatpush1.msra.mxu0 0.0
    %354 = vmatprep.subr.mxu0 0.0
    %355 = vmatpush1.msra.mxu0 0.0
    %356 = vmatprep.subr.mxu0 0.0
    %357 = vmatpush1.msra.mxu0 0.0
    %358 = vmatprep.subr.mxu0 0.0
    %359 = vmatpush1.msra.mxu0 0.0
    %360 = vmatprep.subr.mxu0 0.0
    %361 = vmatpush1.msra.mxu0 0.0
    %362 = vmatprep.subr.mxu0 0.0
    %363 = vmatpush1.msra.mxu0 0.0
    %364 = vmatprep.subr.mxu0 0.0
    %365 = vmatpush1.msra.mxu0 0.0
    %366 = vmatprep.subr.mxu0 0.0
    %367 = vmatpush1.msra.mxu0 0.0
    %368 = vmatprep.subr.mxu0 0.0
    %369 = vmatpush1.msra.mxu0 0.0
    %370 = vmatprep.subr.mxu0 0.0
    %371 = vmatpush1.msra.mxu0 0.0
    %372 = vmatprep.subr.mxu0 0.0
    %373 = vmatpush1.msra.mxu0 0.0
    %374 = vmatprep.subr.mxu0 0.0
    %375 = vmatpush1.msra.mxu0 0.0
    %376 = vmatprep.subr.mxu0 0.0
    %377 = vmatpush1.msra.mxu0 0.0
    %378 = vmatprep.subr.mxu0 0.0
    %379 = vmatpush1.msra.mxu0 0.0
    %380 = vmatprep.subr.mxu0 0.0
    %381 = vmatpush1.msra.mxu0 0.0
    %382 = vmatprep.subr.mxu0 0.0
    %383 = vmatpush1.msra.mxu0 0.0
    %384 = vmatprep.mubr.f32.mxu0 0.0
    %v385 = vand.u32 %v64, 4294901760
    %v386 = vsub.f32 %v64, %v385
    %v387 = vand.u32 %v386, 4294901760
    %388 = vmatmul.mubr.f32.gmra.mrb[0].mxu0 %v387
    %v389 = vpop.f32.mrb[0].mxu0
    %v390 = vadd.f32 %v313, %v389
    %v391 = vpop.f32.mrb[0].mxu0
    %392 = vdwg.mxu0
    %393 = vmatprep.subr.mxu0 0.0
    %v394 = vand.u32 %v51, 4294901760
    %v395 = vsub.f32 %v51, %v394
    %v396 = vand.u32 %v395, 4294901760
    %397 = vmatpush1.msra.mxu0 %v396
    %398 = vmatprep.subr.mxu0 0.0
    %v399 = vand.u32 %v52, 4294901760
    %v400 = vsub.f32 %v52, %v399
    %v401 = vand.u32 %v400, 4294901760
    %402 = vmatpush1.msra.mxu0 %v401
    %403 = vmatprep.subr.mxu0 0.0
    %v404 = vand.u32 %v53, 4294901760
    %v405 = vsub.f32 %v53, %v404
    %v406 = vand.u32 %v405, 4294901760
    %407 = vmatpush1.msra.mxu0 %v406
    %408 = vmatprep.subr.mxu0 0.0
    %v409 = vand.u32 %v54, 4294901760
    %v410 = vsub.f32 %v54, %v409
    %v411 = vand.u32 %v410, 4294901760
    %412 = vmatpush1.msra.mxu0 %v411
    %413 = vmatprep.subr.mxu0 0.0
    %414 = vmatpush1.msra.mxu0 0.0
    %415 = vmatprep.subr.mxu0 0.0
    %416 = vmatpush1.msra.mxu0 0.0
    %417 = vmatprep.subr.mxu0 0.0
    %418 = vmatpush1.msra.mxu0 0.0
    %419 = vmatprep.subr.mxu0 0.0
    %420 = vmatpush1.msra.mxu0 0.0
    %421 = vmatprep.subr.mxu0 0.0
    %422 = vmatpush1.msra.mxu0 0.0
    %423 = vmatprep.subr.mxu0 0.0
    %424 = vmatpush1.msra.mxu0 0.0
    %425 = vmatprep.subr.mxu0 0.0
    %426 = vmatpush1.msra.mxu0 0.0
    %427 = vmatprep.subr.mxu0 0.0
    %428 = vmatpush1.msra.mxu0 0.0
    %429 = vmatprep.subr.mxu0 0.0
    %430 = vmatpush1.msra.mxu0 0.0
    %431 = vmatprep.subr.mxu0 0.0
    %432 = vmatpush1.msra.mxu0 0.0
    %433 = vmatprep.subr.mxu0 0.0
    %434 = vmatpush1.msra.mxu0 0.0
    %435 = vmatprep.subr.mxu0 0.0
    %436 = vmatpush1.msra.mxu0 0.0
    %437 = vmatprep.subr.mxu0 0.0
    %438 = vmatpush1.msra.mxu0 0.0
    %439 = vmatprep.subr.mxu0 0.0
    %440 = vmatpush1.msra.mxu0 0.0
    %441 = vmatprep.subr.mxu0 0.0
    %442 = vmatpush1.msra.mxu0 0.0
    %443 = vmatprep.subr.mxu0 0.0
    %444 = vmatpush1.msra.mxu0 0.0
    %445 = vmatprep.subr.mxu0 0.0
    %446 = vmatpush1.msra.mxu0 0.0
    %447 = vmatprep.subr.mxu0 0.0
    %448 = vmatpush1.msra.mxu0 0.0
    %449 = vmatprep.subr.mxu0 0.0
    %450 = vmatpush1.msra.mxu0 0.0
    %451 = vmatprep.subr.mxu0 0.0
    %452 = vmatpush1.msra.mxu0 0.0
    %453 = vmatprep.subr.mxu0 0.0
    %454 = vmatpush1.msra.mxu0 0.0
    %455 = vmatprep.subr.mxu0 0.0
    %456 = vmatpush1.msra.mxu0 0.0
    %457 = vmatprep.subr.mxu0 0.0
    %458 = vmatpush1.msra.mxu0 0.0
    %459 = vmatprep.subr.mxu0 0.0
    %460 = vmatpush1.msra.mxu0 0.0
    %461 = vmatprep.subr.mxu0 0.0
    %462 = vmatpush1.msra.mxu0 0.0
    %463 = vmatprep.subr.mxu0 0.0
    %464 = vmatpush1.msra.mxu0 0.0
    %465 = vmatprep.subr.mxu0 0.0
    %466 = vmatpush1.msra.mxu0 0.0
    %467 = vmatprep.subr.mxu0 0.0
    %468 = vmatpush1.msra.mxu0 0.0
    %469 = vmatprep.mubr.f32.mxu0 0.0
    %v470 = vand.u32 %v64, 4294901760
    %471 = vmatmul.mubr.f32.gmra.mrb[0].mxu0 %v470
    %v472 = vpop.f32.mrb[0].mxu0
    %v473 = vadd.f32 %v390, %v472
    %v474 = vpop.f32.mrb[0].mxu0
    %475 = vdwg.mxu0
    %476 = vmatprep.subr.mxu0 0.0
    %v477 = vand.u32 %v51, 4294901760
    %478 = vmatpush1.msra.mxu0 %v477
    %479 = vmatprep.subr.mxu0 0.0
    %v480 = vand.u32 %v52, 4294901760
    %481 = vmatpush1.msra.mxu0 %v480
    %482 = vmatprep.subr.mxu0 0.0
    %v483 = vand.u32 %v53, 4294901760
    %484 = vmatpush1.msra.mxu0 %v483
    %485 = vmatprep.subr.mxu0 0.0
    %v486 = vand.u32 %v54, 4294901760
    %487 = vmatpush1.msra.mxu0 %v486
    %488 = vmatprep.subr.mxu0 0.0
    %489 = vmatpush1.msra.mxu0 0.0
    %490 = vmatprep.subr.mxu0 0.0
    %491 = vmatpush1.msra.mxu0 0.0
    %492 = vmatprep.subr.mxu0 0.0
    %493 = vmatpush1.msra.mxu0 0.0
    %494 = vmatprep.subr.mxu0 0.0
    %495 = vmatpush1.msra.mxu0 0.0
    %496 = vmatprep.subr.mxu0 0.0
    %497 = vmatpush1.msra.mxu0 0.0
    %498 = vmatprep.subr.mxu0 0.0
    %499 = vmatpush1.msra.mxu0 0.0
    %500 = vmatprep.subr.mxu0 0.0
    %501 = vmatpush1.msra.mxu0 0.0
    %502 = vmatprep.subr.mxu0 0.0
    %503 = vmatpush1.msra.mxu0 0.0
    %504 = vmatprep.subr.mxu0 0.0
    %505 = vmatpush1.msra.mxu0 0.0
    %506 = vmatprep.subr.mxu0 0.0
    %507 = vmatpush1.msra.mxu0 0.0
    %508 = vmatprep.subr.mxu0 0.0
    %509 = vmatpush1.msra.mxu0 0.0
    %510 = vmatprep.subr.mxu0 0.0
    %511 = vmatpush1.msra.mxu0 0.0
    %512 = vmatprep.subr.mxu0 0.0
    %513 = vmatpush1.msra.mxu0 0.0
    %514 = vmatprep.subr.mxu0 0.0
    %515 = vmatpush1.msra.mxu0 0.0
    %516 = vmatprep.subr.mxu0 0.0
    %517 = vmatpush1.msra.mxu0 0.0
    %518 = vmatprep.subr.mxu0 0.0
    %519 = vmatpush1.msra.mxu0 0.0
    %520 = vmatprep.subr.mxu0 0.0
    %521 = vmatpush1.msra.mxu0 0.0
    %522 = vmatprep.subr.mxu0 0.0
    %523 = vmatpush1.msra.mxu0 0.0
    %524 = vmatprep.subr.mxu0 0.0
    %525 = vmatpush1.msra.mxu0 0.0
    %526 = vmatprep.subr.mxu0 0.0
    %527 = vmatpush1.msra.mxu0 0.0
    %528 = vmatprep.subr.mxu0 0.0
    %529 = vmatpush1.msra.mxu0 0.0
    %530 = vmatprep.subr.mxu0 0.0
    %531 = vmatpush1.msra.mxu0 0.0
    %532 = vmatprep.subr.mxu0 0.0
    %533 = vmatpush1.msra.mxu0 0.0
    %534 = vmatprep.subr.mxu0 0.0
    %535 = vmatpush1.msra.mxu0 0.0
    %536 = vmatprep.subr.mxu0 0.0
    %537 = vmatpush1.msra.mxu0 0.0
    %538 = vmatprep.subr.mxu0 0.0
    %539 = vmatpush1.msra.mxu0 0.0
    %540 = vmatprep.subr.mxu0 0.0
    %541 = vmatpush1.msra.mxu0 0.0
    %542 = vmatprep.subr.mxu0 0.0
    %543 = vmatpush1.msra.mxu0 0.0
    %544 = vmatprep.mubr.f32.mxu0 0.0
    %v545 = vand.u32 %v64, 4294901760
    %546 = vmatmul.mubr.f32.gmra.mrb[0].mxu0 %v545
    %v547 = vpop.f32.mrb[0].mxu0
    %v548 = vadd.f32 %v473, %v547
    %v549 = vpop.f32.mrb[0].mxu0
    %550 = vdwg.mxu0
    %v551 = vmax.f32 %v548, 0.0
    %v552 = vld [vmem:[%s4] sm:$0xff]
    %v553 = vld [vmem:[%s4 + $0x8] sm:$0xff]
    %v554 = vld [vmem:[%s4 + $0x10] sm:$0xff]
    %v555 = vld [vmem:[%s4 + $0x18] sm:$0xff]
    %v556 = vld [vmem:[%s4 + $0x20] sm:$0xff]
    %v557 = vld [vmem:[%s4 + $0x28] sm:$0xff]
    %v558 = vld [vmem:[%s4 + $0x30] sm:$0xff]
    %v559 = vld [vmem:[%s4 + $0x38] sm:$0xff]
    %v560 = vld [vmem:[%s5] sm:$0x1]
    %v562 = vlaneseq
    %v563 = vshrl.u32 %v562, 7
    %v564 = vsub.s32 0, %v563
    %v565 = vrot.slane %v560, %v564
    %vm567 = vcmask 523264
    %v569 = vsel %vm567, %v551, 0
    %571 = vmatprep.subr.mxu0 0.0
    %v572 = vand.u32 %v552, 4294901760
    %573 = vmatpush1.msra.mxu0 %v572
    %574 = vmatprep.subr.mxu0 0.0
    %v575 = vand.u32 %v553, 4294901760
    %576 = vmatpush1.msra.mxu0 %v575
    %577 = vmatprep.subr.mxu0 0.0
    %v578 = vand.u32 %v554, 4294901760
    %579 = vmatpush1.msra.mxu0 %v578
    %580 = vmatprep.subr.mxu0 0.0
    %v581 = vand.u32 %v555, 4294901760
    %582 = vmatpush1.msra.mxu0 %v581
    %583 = vmatprep.subr.mxu0 0.0
    %v584 = vand.u32 %v556, 4294901760
    %585 = vmatpush1.msra.mxu0 %v584
    %586 = vmatprep.subr.mxu0 0.0
    %v587 = vand.u32 %v557, 4294901760
    %588 = vmatpush1.msra.mxu0 %v587
    %589 = vmatprep.subr.mxu0 0.0
    %v590 = vand.u32 %v558, 4294901760
    %591 = vmatpush1.msra.mxu0 %v590
    %592 = vmatprep.subr.mxu0 0.0
    %v593 = vand.u32 %v559, 4294901760
    %594 = vmatpush1.msra.mxu0 %v593
    %595 = vmatprep.subr.mxu0 0.0
    %596 = vmatpush1.msra.mxu0 0.0
    %597 = vmatprep.subr.mxu0 0.0
    %598 = vmatpush1.msra.mxu0 0.0
    %599 = vmatprep.subr.mxu0 0.0
    %600 = vmatpush1.msra.mxu0 0.0
    %601 = vmatprep.subr.mxu0 0.0
    %602 = vmatpush1.msra.mxu0 0.0
    %603 = vmatprep.subr.mxu0 0.0
    %604 = vmatpush1.msra.mxu0 0.0
    %605 = vmatprep.subr.mxu0 0.0
    %606 = vmatpush1.msra.mxu0 0.0
    %607 = vmatprep.subr.mxu0 0.0
    %608 = vmatpush1.msra.mxu0 0.0
    %609 = vmatprep.subr.mxu0 0.0
    %610 = vmatpush1.msra.mxu0 0.0
    %611 = vmatprep.subr.mxu0 0.0
    %612 = vmatpush1.msra.mxu0 0.0
    %613 = vmatprep.subr.mxu0 0.0
    %614 = vmatpush1.msra.mxu0 0.0
    %615 = vmatprep.subr.mxu0 0.0
    %616 = vmatpush1.msra.mxu0 0.0
    %617 = vmatprep.subr.mxu0 0.0
    %618 = vmatpush1.msra.mxu0 0.0
    %619 = vmatprep.subr.mxu0 0.0
    %620 = vmatpush1.msra.mxu0 0.0
    %621 = vmatprep.subr.mxu0 0.0
    %622 = vmatpush1.msra.mxu0 0.0
    %623 = vmatprep.subr.mxu0 0.0
    %624 = vmatpush1.msra.mxu0 0.0
    %625 = vmatprep.subr.mxu0 0.0
    %626 = vmatpush1.msra.mxu0 0.0
    %627 = vmatprep.subr.mxu0 0.0
    %628 = vmatpush1.msra.mxu0 0.0
    %629 = vmatprep.subr.mxu0 0.0
    %630 = vmatpush1.msra.mxu0 0.0
    %631 = vmatprep.subr.mxu0 0.0
    %632 = vmatpush1.msra.mxu0 0.0
    %633 = vmatprep.subr.mxu0 0.0
    %634 = vmatpush1.msra.mxu0 0.0
    %635 = vmatprep.subr.mxu0 0.0
    %636 = vmatpush1.msra.mxu0 0.0
    %637 = vmatprep.subr.mxu0 0.0
    %638 = vmatpush1.msra.mxu0 0.0
    %639 = vmatprep.subr.mxu0 0.0
    %640 = vmatpush1.msra.mxu0 0.0
    %641 = vmatprep.subr.mxu0 0.0
    %642 = vmatpush1.msra.mxu0 0.0
    %643 = vmatprep.mubr.f32.mxu0 0.0
    %v644 = vand.u32 %v569, 4294901760
    %v645 = vsub.f32 %v569, %v644
    %v646 = vand.u32 %v645, 4294901760
    %v647 = vsub.f32 %v645, %v646
    %v648 = vand.u32 %v647, 4294901760
    %649 = vmatmul.mubr.f32.gmra.mrb[0].mxu0 %v648
    %v650 = vpop.f32.mrb[0].mxu0
    %v651 = vadd.f32 %v565, %v650
    %v652 = vpop.f32.mrb[0].mxu0
    %653 = vdwg.mxu0
    %654 = vmatprep.subr.mxu0 0.0
    %v655 = vand.u32 %v552, 4294901760
    %v656 = vsub.f32 %v552, %v655
    %v657 = vand.u32 %v656, 4294901760
    %v658 = vsub.f32 %v656, %v657
    %v659 = vand.u32 %v658, 4294901760
    %660 = vmatpush1.msra.mxu0 %v659
    %661 = vmatprep.subr.mxu0 0.0
    %v662 = vand.u32 %v553, 4294901760
    %v663 = vsub.f32 %v553, %v662
    %v664 = vand.u32 %v663, 4294901760
    %v665 = vsub.f32 %v663, %v664
    %v666 = vand.u32 %v665, 4294901760
    %667 = vmatpush1.msra.mxu0 %v666
    %668 = vmatprep.subr.mxu0 0.0
    %v669 = vand.u32 %v554, 4294901760
    %v670 = vsub.f32 %v554, %v669
    %v671 = vand.u32 %v670, 4294901760
    %v672 = vsub.f32 %v670, %v671
    %v673 = vand.u32 %v672, 4294901760
    %674 = vmatpush1.msra.mxu0 %v673
    %675 = vmatprep.subr.mxu0 0.0
    %v676 = vand.u32 %v555, 4294901760
    %v677 = vsub.f32 %v555, %v676
    %v678 = vand.u32 %v677, 4294901760
    %v679 = vsub.f32 %v677, %v678
    %v680 = vand.u32 %v679, 4294901760
    %681 = vmatpush1.msra.mxu0 %v680
    %682 = vmatprep.subr.mxu0 0.0
    %v683 = vand.u32 %v556, 4294901760
    %v684 = vsub.f32 %v556, %v683
    %v685 = vand.u32 %v684, 4294901760
    %v686 = vsub.f32 %v684, %v685
    %v687 = vand.u32 %v686, 4294901760
    %688 = vmatpush1.msra.mxu0 %v687
    %689 = vmatprep.subr.mxu0 0.0
    %v690 = vand.u32 %v557, 4294901760
    %v691 = vsub.f32 %v557, %v690
    %v692 = vand.u32 %v691, 4294901760
    %v693 = vsub.f32 %v691, %v692
    %v694 = vand.u32 %v693, 4294901760
    %695 = vmatpush1.msra.mxu0 %v694
    %696 = vmatprep.subr.mxu0 0.0
    %v697 = vand.u32 %v558, 4294901760
    %v698 = vsub.f32 %v558, %v697
    %v699 = vand.u32 %v698, 4294901760
    %v700 = vsub.f32 %v698, %v699
    %v701 = vand.u32 %v700, 4294901760
    %702 = vmatpush1.msra.mxu0 %v701
    %703 = vmatprep.subr.mxu0 0.0
    %v704 = vand.u32 %v559, 4294901760
    %v705 = vsub.f32 %v559, %v704
    %v706 = vand.u32 %v705, 4294901760
    %v707 = vsub.f32 %v705, %v706
    %v708 = vand.u32 %v707, 4294901760
    %709 = vmatpush1.msra.mxu0 %v708
    %710 = vmatprep.subr.mxu0 0.0
    %711 = vmatpush1.msra.mxu0 0.0
    %712 = vmatprep.subr.mxu0 0.0
    %713 = vmatpush1.msra.mxu0 0.0
    %714 = vmatprep.subr.mxu0 0.0
    %715 = vmatpush1.msra.mxu0 0.0
    %716 = vmatprep.subr.mxu0 0.0
    %717 = vmatpush1.msra.mxu0 0.0
    %718 = vmatprep.subr.mxu0 0.0
    %719 = vmatpush1.msra.mxu0 0.0
    %720 = vmatprep.subr.mxu0 0.0
    %721 = vmatpush1.msra.mxu0 0.0
    %722 = vmatprep.subr.mxu0 0.0
    %723 = vmatpush1.msra.mxu0 0.0
    %724 = vmatprep.subr.mxu0 0.0
    %725 = vmatpush1.msra.mxu0 0.0
    %726 = vmatprep.subr.mxu0 0.0
    %727 = vmatpush1.msra.mxu0 0.0
    %728 = vmatprep.subr.mxu0 0.0
    %729 = vmatpush1.msra.mxu0 0.0
    %730 = vmatprep.subr.mxu0 0.0
    %731 = vmatpush1.msra.mxu0 0.0
    %732 = vmatprep.subr.mxu0 0.0
    %733 = vmatpush1.msra.mxu0 0.0
    %734 = vmatprep.subr.mxu0 0.0
    %735 = vmatpush1.msra.mxu0 0.0
    %736 = vmatprep.subr.mxu0 0.0
    %737 = vmatpush1.msra.mxu0 0.0
    %738 = vmatprep.subr.mxu0 0.0
    %739 = vmatpush1.msra.mxu0 0.0
    %740 = vmatprep.subr.mxu0 0.0
    %741 = vmatpush1.msra.mxu0 0.0
    %742 = vmatprep.subr.mxu0 0.0
    %743 = vmatpush1.msra.mxu0 0.0
    %744 = vmatprep.subr.mxu0 0.0
    %745 = vmatpush1.msra.mxu0 0.0
    %746 = vmatprep.subr.mxu0 0.0
    %747 = vmatpush1.msra.mxu0 0.0
    %748 = vmatprep.subr.mxu0 0.0
    %749 = vmatpush1.msra.mxu0 0.0
    %750 = vmatprep.subr.mxu0 0.0
    %751 = vmatpush1.msra.mxu0 0.0
    %752 = vmatprep.subr.mxu0 0.0
    %753 = vmatpush1.msra.mxu0 0.0
    %754 = vmatprep.subr.mxu0 0.0
    %755 = vmatpush1.msra.mxu0 0.0
    %756 = vmatprep.subr.mxu0 0.0
    %757 = vmatpush1.msra.mxu0 0.0
    %758 = vmatprep.mubr.f32.mxu0 0.0
    %v759 = vand.u32 %v569, 4294901760
    %760 = vmatmul.mubr.f32.gmra.mrb[0].mxu0 %v759
    %v761 = vpop.f32.mrb[0].mxu0
    %v762 = vadd.f32 %v651, %v761
    %v763 = vpop.f32.mrb[0].mxu0
    %764 = vdwg.mxu0
    %765 = vmatprep.subr.mxu0 0.0
    %v766 = vand.u32 %v552, 4294901760
    %v767 = vsub.f32 %v552, %v766
    %768 = vmatpush1.msra.mxu0 %v767
    %769 = vmatprep.subr.mxu0 0.0
    %v770 = vand.u32 %v553, 4294901760
    %v771 = vsub.f32 %v553, %v770
    %772 = vmatpush1.msra.mxu0 %v771
    %773 = vmatprep.subr.mxu0 0.0
    %v774 = vand.u32 %v554, 4294901760
    %v775 = vsub.f32 %v554, %v774
    %776 = vmatpush1.msra.mxu0 %v775
    %777 = vmatprep.subr.mxu0 0.0
    %v778 = vand.u32 %v555, 4294901760
    %v779 = vsub.f32 %v555, %v778
    %780 = vmatpush1.msra.mxu0 %v779
    %781 = vmatprep.subr.mxu0 0.0
    %v782 = vand.u32 %v556, 4294901760
    %v783 = vsub.f32 %v556, %v782
    %784 = vmatpush1.msra.mxu0 %v783
    %785 = vmatprep.subr.mxu0 0.0
    %v786 = vand.u32 %v557, 4294901760
    %v787 = vsub.f32 %v557, %v786
    %788 = vmatpush1.msra.mxu0 %v787
    %789 = vmatprep.subr.mxu0 0.0
    %v790 = vand.u32 %v558, 4294901760
    %v791 = vsub.f32 %v558, %v790
    %792 = vmatpush1.msra.mxu0 %v791
    %793 = vmatprep.subr.mxu0 0.0
    %v794 = vand.u32 %v559, 4294901760
    %v795 = vsub.f32 %v559, %v794
    %796 = vmatpush1.msra.mxu0 %v795
    %797 = vmatprep.subr.mxu0 0.0
    %798 = vmatpush1.msra.mxu0 0.0
    %799 = vmatprep.subr.mxu0 0.0
    %800 = vmatpush1.msra.mxu0 0.0
    %801 = vmatprep.subr.mxu0 0.0
    %802 = vmatpush1.msra.mxu0 0.0
    %803 = vmatprep.subr.mxu0 0.0
    %804 = vmatpush1.msra.mxu0 0.0
    %805 = vmatprep.subr.mxu0 0.0
    %806 = vmatpush1.msra.mxu0 0.0
    %807 = vmatprep.subr.mxu0 0.0
    %808 = vmatpush1.msra.mxu0 0.0
    %809 = vmatprep.subr.mxu0 0.0
    %810 = vmatpush1.msra.mxu0 0.0
    %811 = vmatprep.subr.mxu0 0.0
    %812 = vmatpush1.msra.mxu0 0.0
    %813 = vmatprep.subr.mxu0 0.0
    %814 = vmatpush1.msra.mxu0 0.0
    %815 = vmatprep.subr.mxu0 0.0
    %816 = vmatpush1.msra.mxu0 0.0
    %817 = vmatprep.subr.mxu0 0.0
    %818 = vmatpush1.msra.mxu0 0.0
    %819 = vmatprep.subr.mxu0 0.0
    %820 = vmatpush1.msra.mxu0 0.0
    %821 = vmatprep.subr.mxu0 0.0
    %822 = vmatpush1.msra.mxu0 0.0
    %823 = vmatprep.subr.mxu0 0.0
    %824 = vmatpush1.msra.mxu0 0.0
    %825 = vmatprep.subr.mxu0 0.0
    %826 = vmatpush1.msra.mxu0 0.0
    %827 = vmatprep.subr.mxu0 0.0
    %828 = vmatpush1.msra.mxu0 0.0
    %829 = vmatprep.subr.mxu0 0.0
    %830 = vmatpush1.msra.mxu0 0.0
    %831 = vmatprep.subr.mxu0 0.0
    %832 = vmatpush1.msra.mxu0 0.0
    %833 = vmatprep.subr.mxu0 0.0
    %834 = vmatpush1.msra.mxu0 0.0
    %835 = vmatprep.subr.mxu0 0.0
    %836 = vmatpush1.msra.mxu0 0.0
    %837 = vmatprep.subr.mxu0 0.0
    %838 = vmatpush1.msra.mxu0 0.0
    %839 = vmatprep.subr.mxu0 0.0
    %840 = vmatpush1.msra.mxu0 0.0
    %841 = vmatprep.subr.mxu0 0.0
    %842 = vmatpush1.msra.mxu0 0.0
    %843 = vmatprep.subr.mxu0 0.0
    %844 = vmatpush1.msra.mxu0 0.0
    %845 = vmatprep.mubr.f32.mxu0 0.0
    %v846 = vand.u32 %v569, 4294901760
    %v847 = vsub.f32 %v569, %v846
    %848 = vmatmul.mubr.f32.gmra.mrb[0].mxu0 %v847
    %v849 = vpop.f32.mrb[0].mxu0
    %v850 = vadd.f32 %v762, %v849
    %v851 = vpop.f32.mrb[0].mxu0
    %852 = vdwg.mxu0
    %853 = vmatprep.subr.mxu0 0.0
    %v854 = vand.u32 %v552, 4294901760
    %855 = vmatpush1.msra.mxu0 %v854
    %856 = vmatprep.subr.mxu0 0.0
    %v857 = vand.u32 %v553, 4294901760
    %858 = vmatpush1.msra.mxu0 %v857
    %859 = vmatprep.subr.mxu0 0.0
    %v860 = vand.u32 %v554, 4294901760
    %861 = vmatpush1.msra.mxu0 %v860
    %862 = vmatprep.subr.mxu0 0.0
    %v863 = vand.u32 %v555, 4294901760
    %864 = vmatpush1.msra.mxu0 %v863
    %865 = vmatprep.subr.mxu0 0.0
    %v866 = vand.u32 %v556, 4294901760
    %867 = vmatpush1.msra.mxu0 %v866
    %868 = vmatprep.subr.mxu0 0.0
    %v869 = vand.u32 %v557, 4294901760
    %870 = vmatpush1.msra.mxu0 %v869
    %871 = vmatprep.subr.mxu0 0.0
    %v872 = vand.u32 %v558, 4294901760
    %873 = vmatpush1.msra.mxu0 %v872
    %874 = vmatprep.subr.mxu0 0.0
    %v875 = vand.u32 %v559, 4294901760
    %876 = vmatpush1.msra.mxu0 %v875
    %877 = vmatprep.subr.mxu0 0.0
    %878 = vmatpush1.msra.mxu0 0.0
    %879 = vmatprep.subr.mxu0 0.0
    %880 = vmatpush1.msra.mxu0 0.0
    %881 = vmatprep.subr.mxu0 0.0
    %882 = vmatpush1.msra.mxu0 0.0
    %883 = vmatprep.subr.mxu0 0.0
    %884 = vmatpush1.msra.mxu0 0.0
    %885 = vmatprep.subr.mxu0 0.0
    %886 = vmatpush1.msra.mxu0 0.0
    %887 = vmatprep.subr.mxu0 0.0
    %888 = vmatpush1.msra.mxu0 0.0
    %889 = vmatprep.subr.mxu0 0.0
    %890 = vmatpush1.msra.mxu0 0.0
    %891 = vmatprep.subr.mxu0 0.0
    %892 = vmatpush1.msra.mxu0 0.0
    %893 = vmatprep.subr.mxu0 0.0
    %894 = vmatpush1.msra.mxu0 0.0
    %895 = vmatprep.subr.mxu0 0.0
    %896 = vmatpush1.msra.mxu0 0.0
    %897 = vmatprep.subr.mxu0 0.0
    %898 = vmatpush1.msra.mxu0 0.0
    %899 = vmatprep.subr.mxu0 0.0
    %900 = vmatpush1.msra.mxu0 0.0
    %901 = vmatprep.subr.mxu0 0.0
    %902 = vmatpush1.msra.mxu0 0.0
    %903 = vmatprep.subr.mxu0 0.0
    %904 = vmatpush1.msra.mxu0 0.0
    %905 = vmatprep.subr.mxu0 0.0
    %906 = vmatpush1.msra.mxu0 0.0
    %907 = vmatprep.subr.mxu0 0.0
    %908 = vmatpush1.msra.mxu0 0.0
    %909 = vmatprep.subr.mxu0 0.0
    %910 = vmatpush1.msra.mxu0 0.0
    %911 = vmatprep.subr.mxu0 0.0
    %912 = vmatpush1.msra.mxu0 0.0
    %913 = vmatprep.subr.mxu0 0.0
    %914 = vmatpush1.msra.mxu0 0.0
    %915 = vmatprep.subr.mxu0 0.0
    %916 = vmatpush1.msra.mxu0 0.0
    %917 = vmatprep.subr.mxu0 0.0
    %918 = vmatpush1.msra.mxu0 0.0
    %919 = vmatprep.subr.mxu0 0.0
    %920 = vmatpush1.msra.mxu0 0.0
    %921 = vmatprep.subr.mxu0 0.0
    %922 = vmatpush1.msra.mxu0 0.0
    %923 = vmatprep.subr.mxu0 0.0
    %924 = vmatpush1.msra.mxu0 0.0
    %925 = vmatprep.mubr.f32.mxu0 0.0
    %v926 = vand.u32 %v569, 4294901760
    %v927 = vsub.f32 %v569, %v926
    %v928 = vand.u32 %v927, 4294901760
    %929 = vmatmul.mubr.f32.gmra.mrb[0].mxu0 %v928
    %v930 = vpop.f32.mrb[0].mxu0
    %v931 = vadd.f32 %v850, %v930
    %v932 = vpop.f32.mrb[0].mxu0
    %933 = vdwg.mxu0
    %934 = vmatprep.subr.mxu0 0.0
    %v935 = vand.u32 %v552, 4294901760
    %v936 = vsub.f32 %v552, %v935
    %v937 = vand.u32 %v936, 4294901760
    %938 = vmatpush1.msra.mxu0 %v937
    %939 = vmatprep.subr.mxu0 0.0
    %v940 = vand.u32 %v553, 4294901760
    %v941 = vsub.f32 %v553, %v940
    %v942 = vand.u32 %v941, 4294901760
    %943 = vmatpush1.msra.mxu0 %v942
    %944 = vmatprep.subr.mxu0 0.0
    %v945 = vand.u32 %v554, 4294901760
    %v946 = vsub.f32 %v554, %v945
    %v947 = vand.u32 %v946, 4294901760
    %948 = vmatpush1.msra.mxu0 %v947
    %949 = vmatprep.subr.mxu0 0.0
    %v950 = vand.u32 %v555, 4294901760
    %v951 = vsub.f32 %v555, %v950
    %v952 = vand.u32 %v951, 4294901760
    %953 = vmatpush1.msra.mxu0 %v952
    %954 = vmatprep.subr.mxu0 0.0
    %v955 = vand.u32 %v556, 4294901760
    %v956 = vsub.f32 %v556, %v955
    %v957 = vand.u32 %v956, 4294901760
    %958 = vmatpush1.msra.mxu0 %v957
    %959 = vmatprep.subr.mxu0 0.0
    %v960 = vand.u32 %v557, 4294901760
    %v961 = vsub.f32 %v557, %v960
    %v962 = vand.u32 %v961, 4294901760
    %963 = vmatpush1.msra.mxu0 %v962
    %964 = vmatprep.subr.mxu0 0.0
    %v965 = vand.u32 %v558, 4294901760
    %v966 = vsub.f32 %v558, %v965
    %v967 = vand.u32 %v966, 4294901760
    %968 = vmatpush1.msra.mxu0 %v967
    %969 = vmatprep.subr.mxu0 0.0
    %v970 = vand.u32 %v559, 4294901760
    %v971 = vsub.f32 %v559, %v970
    %v972 = vand.u32 %v971, 4294901760
    %973 = vmatpush1.msra.mxu0 %v972
    %974 = vmatprep.subr.mxu0 0.0
    %975 = vmatpush1.msra.mxu0 0.0
    %976 = vmatprep.subr.mxu0 0.0
    %977 = vmatpush1.msra.mxu0 0.0
    %978 = vmatprep.subr.mxu0 0.0
    %979 = vmatpush1.msra.mxu0 0.0
    %980 = vmatprep.subr.mxu0 0.0
    %981 = vmatpush1.msra.mxu0 0.0
    %982 = vmatprep.subr.mxu0 0.0
    %983 = vmatpush1.msra.mxu0 0.0
    %984 = vmatprep.subr.mxu0 0.0
    %985 = vmatpush1.msra.mxu0 0.0
    %986 = vmatprep.subr.mxu0 0.0
    %987 = vmatpush1.msra.mxu0 0.0
    %988 = vmatprep.subr.mxu0 0.0
    %989 = vmatpush1.msra.mxu0 0.0
    %990 = vmatprep.subr.mxu0 0.0
    %991 = vmatpush1.msra.mxu0 0.0
    %992 = vmatprep.subr.mxu0 0.0
    %993 = vmatpush1.msra.mxu0 0.0
    %994 = vmatprep.subr.mxu0 0.0
    %995 = vmatpush1.msra.mxu0 0.0
    %996 = vmatprep.subr.mxu0 0.0
    %997 = vmatpush1.msra.mxu0 0.0
    %998 = vmatprep.subr.mxu0 0.0
    %999 = vmatpush1.msra.mxu0 0.0
    %1000 = vmatprep.subr.mxu0 0.0
    %1001 = vmatpush1.msra.mxu0 0.0
    %1002 = vmatprep.subr.mxu0 0.0
    %1003 = vmatpush1.msra.mxu0 0.0
    %1004 = vmatprep.subr.mxu0 0.0
    %1005 = vmatpush1.msra.mxu0 0.0
    %1006 = vmatprep.subr.mxu0 0.0
    %1007 = vmatpush1.msra.mxu0 0.0
    %1008 = vmatprep.subr.mxu0 0.0
    %1009 = vmatpush1.msra.mxu0 0.0
    %1010 = vmatprep.subr.mxu0 0.0
    %1011 = vmatpush1.msra.mxu0 0.0
    %1012 = vmatprep.subr.mxu0 0.0
    %1013 = vmatpush1.msra.mxu0 0.0
    %1014 = vmatprep.subr.mxu0 0.0
    %1015 = vmatpush1.msra.mxu0 0.0
    %1016 = vmatprep.subr.mxu0 0.0
    %1017 = vmatpush1.msra.mxu0 0.0
    %1018 = vmatprep.subr.mxu0 0.0
    %1019 = vmatpush1.msra.mxu0 0.0
    %1020 = vmatprep.subr.mxu0 0.0
    %1021 = vmatpush1.msra.mxu0 0.0
    %1022 = vmatprep.mubr.f32.mxu0 0.0
    %v1023 = vand.u32 %v569, 4294901760
    %1024 = vmatmul.mubr.f32.gmra.mrb[0].mxu0 %v1023
    %v1025 = vpop.f32.mrb[0].mxu0
    %v1026 = vadd.f32 %v931, %v1025
    %v1027 = vpop.f32.mrb[0].mxu0
    %1028 = vdwg.mxu0
    %1029 = vmatprep.subr.mxu0 0.0
    %v1030 = vand.u32 %v552, 4294901760
    %1031 = vmatpush1.msra.mxu0 %v1030
    %1032 = vmatprep.subr.mxu0 0.0
    %v1033 = vand.u32 %v553, 4294901760
    %1034 = vmatpush1.msra.mxu0 %v1033
    %1035 = vmatprep.subr.mxu0 0.0
    %v1036 = vand.u32 %v554, 4294901760
    %1037 = vmatpush1.msra.mxu0 %v1036
    %1038 = vmatprep.subr.mxu0 0.0
    %v1039 = vand.u32 %v555, 4294901760
    %1040 = vmatpush1.msra.mxu0 %v1039
    %1041 = vmatprep.subr.mxu0 0.0
    %v1042 = vand.u32 %v556, 4294901760
    %1043 = vmatpush1.msra.mxu0 %v1042
    %1044 = vmatprep.subr.mxu0 0.0
    %v1045 = vand.u32 %v557, 4294901760
    %1046 = vmatpush1.msra.mxu0 %v1045
    %1047 = vmatprep.subr.mxu0 0.0
    %v1048 = vand.u32 %v558, 4294901760
    %1049 = vmatpush1.msra.mxu0 %v1048
    %1050 = vmatprep.subr.mxu0 0.0
    %v1051 = vand.u32 %v559, 4294901760
    %1052 = vmatpush1.msra.mxu0 %v1051
    %1053 = vmatprep.subr.mxu0 0.0
    %1054 = vmatpush1.msra.mxu0 0.0
    %1055 = vmatprep.subr.mxu0 0.0
    %1056 = vmatpush1.msra.mxu0 0.0
    %1057 = vmatprep.subr.mxu0 0.0
    %1058 = vmatpush1.msra.mxu0 0.0
    %1059 = vmatprep.subr.mxu0 0.0
    %1060 = vmatpush1.msra.mxu0 0.0
    %1061 = vmatprep.subr.mxu0 0.0
    %1062 = vmatpush1.msra.mxu0 0.0
    %1063 = vmatprep.subr.mxu0 0.0
    %1064 = vmatpush1.msra.mxu0 0.0
    %1065 = vmatprep.subr.mxu0 0.0
    %1066 = vmatpush1.msra.mxu0 0.0
    %1067 = vmatprep.subr.mxu0 0.0
    %1068 = vmatpush1.msra.mxu0 0.0
    %1069 = vmatprep.subr.mxu0 0.0
    %1070 = vmatpush1.msra.mxu0 0.0
    %1071 = vmatprep.subr.mxu0 0.0
    %1072 = vmatpush1.msra.mxu0 0.0
    %1073 = vmatprep.subr.mxu0 0.0
    %1074 = vmatpush1.msra.mxu0 0.0
    %1075 = vmatprep.subr.mxu0 0.0
    %1076 = vmatpush1.msra.mxu0 0.0
    %1077 = vmatprep.subr.mxu0 0.0
    %1078 = vmatpush1.msra.mxu0 0.0
    %1079 = vmatprep.subr.mxu0 0.0
    %1080 = vmatpush1.msra.mxu0 0.0
    %1081 = vmatprep.subr.mxu0 0.0
    %1082 = vmatpush1.msra.mxu0 0.0
    %1083 = vmatprep.subr.mxu0 0.0
    %1084 = vmatpush1.msra.mxu0 0.0
    %1085 = vmatprep.subr.mxu0 0.0
    %1086 = vmatpush1.msra.mxu0 0.0
    %1087 = vmatprep.subr.mxu0 0.0
    %1088 = vmatpush1.msra.mxu0 0.0
    %1089 = vmatprep.subr.mxu0 0.0
    %1090 = vmatpush1.msra.mxu0 0.0
    %1091 = vmatprep.subr.mxu0 0.0
    %1092 = vmatpush1.msra.mxu0 0.0
    %1093 = vmatprep.subr.mxu0 0.0
    %1094 = vmatpush1.msra.mxu0 0.0
    %1095 = vmatprep.subr.mxu0 0.0
    %1096 = vmatpush1.msra.mxu0 0.0
    %1097 = vmatprep.subr.mxu0 0.0
    %1098 = vmatpush1.msra.mxu0 0.0
    %1099 = vmatprep.subr.mxu0 0.0
    %1100 = vmatpush1.msra.mxu0 0.0
    %1101 = vmatprep.mubr.f32.mxu0 0.0
    %v1102 = vand.u32 %v569, 4294901760
    %1103 = vmatmul.mubr.f32.gmra.mrb[0].mxu0 %v1102
    %v1104 = vpop.f32.mrb[0].mxu0
    %v1105 = vadd.f32 %v1026, %v1104
    %v1106 = vpop.f32.mrb[0].mxu0
    %1107 = vdwg.mxu0
    %v1108 = vmax.f32 %v1105, 0.0
    %v1109 = vld [vmem:[%s6] sm:$0xff]
    %v1110 = vld [vmem:[%s6 + $0x8] sm:$0xff]
    %v1111 = vld [vmem:[%s6 + $0x10] sm:$0xff]
    %v1112 = vld [vmem:[%s6 + $0x18] sm:$0xff]
    %v1113 = vld [vmem:[%s6 + $0x20] sm:$0xff]
    %v1114 = vld [vmem:[%s6 + $0x28] sm:$0xff]
    %v1115 = vld [vmem:[%s6 + $0x30] sm:$0xff]
    %v1116 = vld [vmem:[%s6 + $0x38] sm:$0xff]
    %v1117 = vld [vmem:[%s7] sm:$0x1]
    %v1119 = vlaneseq
    %v1120 = vshrl.u32 %v1119, 7
    %v1121 = vsub.s32 0, %v1120
    %v1122 = vrot.slane %v1117, %v1121
    %v1125 = vsel %vm567, %v1108, 0
    %1127 = vmatprep.subr.mxu0 0.0
    %v1128 = vand.u32 %v1109, 4294901760
    %1129 = vmatpush1.msra.mxu0 %v1128
    %1130 = vmatprep.subr.mxu0 0.0
    %v1131 = vand.u32 %v1110, 4294901760
    %1132 = vmatpush1.msra.mxu0 %v1131
    %1133 = vmatprep.subr.mxu0 0.0
    %v1134 = vand.u32 %v1111, 4294901760
    %1135 = vmatpush1.msra.mxu0 %v1134
    %1136 = vmatprep.subr.mxu0 0.0
    %v1137 = vand.u32 %v1112, 4294901760
    %1138 = vmatpush1.msra.mxu0 %v1137
    %1139 = vmatprep.subr.mxu0 0.0
    %v1140 = vand.u32 %v1113, 4294901760
    %1141 = vmatpush1.msra.mxu0 %v1140
    %1142 = vmatprep.subr.mxu0 0.0
    %v1143 = vand.u32 %v1114, 4294901760
    %1144 = vmatpush1.msra.mxu0 %v1143
    %1145 = vmatprep.subr.mxu0 0.0
    %v1146 = vand.u32 %v1115, 4294901760
    %1147 = vmatpush1.msra.mxu0 %v1146
    %1148 = vmatprep.subr.mxu0 0.0
    %v1149 = vand.u32 %v1116, 4294901760
    %1150 = vmatpush1.msra.mxu0 %v1149
    %1151 = vmatprep.subr.mxu0 0.0
    %1152 = vmatpush1.msra.mxu0 0.0
    %1153 = vmatprep.subr.mxu0 0.0
    %1154 = vmatpush1.msra.mxu0 0.0
    %1155 = vmatprep.subr.mxu0 0.0
    %1156 = vmatpush1.msra.mxu0 0.0
    %1157 = vmatprep.subr.mxu0 0.0
    %1158 = vmatpush1.msra.mxu0 0.0
    %1159 = vmatprep.subr.mxu0 0.0
    %1160 = vmatpush1.msra.mxu0 0.0
    %1161 = vmatprep.subr.mxu0 0.0
    %1162 = vmatpush1.msra.mxu0 0.0
    %1163 = vmatprep.subr.mxu0 0.0
    %1164 = vmatpush1.msra.mxu0 0.0
    %1165 = vmatprep.subr.mxu0 0.0
    %1166 = vmatpush1.msra.mxu0 0.0
    %1167 = vmatprep.subr.mxu0 0.0
    %1168 = vmatpush1.msra.mxu0 0.0
    %1169 = vmatprep.subr.mxu0 0.0
    %1170 = vmatpush1.msra.mxu0 0.0
    %1171 = vmatprep.subr.mxu0 0.0
    %1172 = vmatpush1.msra.mxu0 0.0
    %1173 = vmatprep.subr.mxu0 0.0
    %1174 = vmatpush1.msra.mxu0 0.0
    %1175 = vmatprep.subr.mxu0 0.0
    %1176 = vmatpush1.msra.mxu0 0.0
    %1177 = vmatprep.subr.mxu0 0.0
    %1178 = vmatpush1.msra.mxu0 0.0
    %1179 = vmatprep.subr.mxu0 0.0
    %1180 = vmatpush1.msra.mxu0 0.0
    %1181 = vmatprep.subr.mxu0 0.0
    %1182 = vmatpush1.msra.mxu0 0.0
    %1183 = vmatprep.subr.mxu0 0.0
    %1184 = vmatpush1.msra.mxu0 0.0
    %1185 = vmatprep.subr.mxu0 0.0
    %1186 = vmatpush1.msra.mxu0 0.0
    %1187 = vmatprep.subr.mxu0 0.0
    %1188 = vmatpush1.msra.mxu0 0.0
    %1189 = vmatprep.subr.mxu0 0.0
    %1190 = vmatpush1.msra.mxu0 0.0
    %1191 = vmatprep.subr.mxu0 0.0
    %1192 = vmatpush1.msra.mxu0 0.0
    %1193 = vmatprep.subr.mxu0 0.0
    %1194 = vmatpush1.msra.mxu0 0.0
    %1195 = vmatprep.subr.mxu0 0.0
    %1196 = vmatpush1.msra.mxu0 0.0
    %1197 = vmatprep.subr.mxu0 0.0
    %1198 = vmatpush1.msra.mxu0 0.0
    %1199 = vmatprep.mubr.f32.mxu0 0.0
    %v1200 = vand.u32 %v1125, 4294901760
    %v1201 = vsub.f32 %v1125, %v1200
    %v1202 = vand.u32 %v1201, 4294901760
    %v1203 = vsub.f32 %v1201, %v1202
    %v1204 = vand.u32 %v1203, 4294901760
    %1205 = vmatmul.mubr.f32.gmra.mrb[0].mxu0 %v1204
    %v1206 = vpop.f32.mrb[0].mxu0
    %v1207 = vadd.f32 %v1122, %v1206
    %v1208 = vpop.f32.mrb[0].mxu0
    %1209 = vdwg.mxu0
    %1210 = vmatprep.subr.mxu0 0.0
    %v1211 = vand.u32 %v1109, 4294901760
    %v1212 = vsub.f32 %v1109, %v1211
    %v1213 = vand.u32 %v1212, 4294901760
    %v1214 = vsub.f32 %v1212, %v1213
    %v1215 = vand.u32 %v1214, 4294901760
    %1216 = vmatpush1.msra.mxu0 %v1215
    %1217 = vmatprep.subr.mxu0 0.0
    %v1218 = vand.u32 %v1110, 4294901760
    %v1219 = vsub.f32 %v1110, %v1218
    %v1220 = vand.u32 %v1219, 4294901760
    %v1221 = vsub.f32 %v1219, %v1220
    %v1222 = vand.u32 %v1221, 4294901760
    %1223 = vmatpush1.msra.mxu0 %v1222
    %1224 = vmatprep.subr.mxu0 0.0
    %v1225 = vand.u32 %v1111, 4294901760
    %v1226 = vsub.f32 %v1111, %v1225
    %v1227 = vand.u32 %v1226, 4294901760
    %v1228 = vsub.f32 %v1226, %v1227
    %v1229 = vand.u32 %v1228, 4294901760
    %1230 = vmatpush1.msra.mxu0 %v1229
    %1231 = vmatprep.subr.mxu0 0.0
    %v1232 = vand.u32 %v1112, 4294901760
    %v1233 = vsub.f32 %v1112, %v1232
    %v1234 = vand.u32 %v1233, 4294901760
    %v1235 = vsub.f32 %v1233, %v1234
    %v1236 = vand.u32 %v1235, 4294901760
    %1237 = vmatpush1.msra.mxu0 %v1236
    %1238 = vmatprep.subr.mxu0 0.0
    %v1239 = vand.u32 %v1113, 4294901760
    %v1240 = vsub.f32 %v1113, %v1239
    %v1241 = vand.u32 %v1240, 4294901760
    %v1242 = vsub.f32 %v1240, %v1241
    %v1243 = vand.u32 %v1242, 4294901760
    %1244 = vmatpush1.msra.mxu0 %v1243
    %1245 = vmatprep.subr.mxu0 0.0
    %v1246 = vand.u32 %v1114, 4294901760
    %v1247 = vsub.f32 %v1114, %v1246
    %v1248 = vand.u32 %v1247, 4294901760
    %v1249 = vsub.f32 %v1247, %v1248
    %v1250 = vand.u32 %v1249, 4294901760
    %1251 = vmatpush1.msra.mxu0 %v1250
    %1252 = vmatprep.subr.mxu0 0.0
    %v1253 = vand.u32 %v1115, 4294901760
    %v1254 = vsub.f32 %v1115, %v1253
    %v1255 = vand.u32 %v1254, 4294901760
    %v1256 = vsub.f32 %v1254, %v1255
    %v1257 = vand.u32 %v1256, 4294901760
    %1258 = vmatpush1.msra.mxu0 %v1257
    %1259 = vmatprep.subr.mxu0 0.0
    %v1260 = vand.u32 %v1116, 4294901760
    %v1261 = vsub.f32 %v1116, %v1260
    %v1262 = vand.u32 %v1261, 4294901760
    %v1263 = vsub.f32 %v1261, %v1262
    %v1264 = vand.u32 %v1263, 4294901760
    %1265 = vmatpush1.msra.mxu0 %v1264
    %1266 = vmatprep.subr.mxu0 0.0
    %1267 = vmatpush1.msra.mxu0 0.0
    %1268 = vmatprep.subr.mxu0 0.0
    %1269 = vmatpush1.msra.mxu0 0.0
    %1270 = vmatprep.subr.mxu0 0.0
    %1271 = vmatpush1.msra.mxu0 0.0
    %1272 = vmatprep.subr.mxu0 0.0
    %1273 = vmatpush1.msra.mxu0 0.0
    %1274 = vmatprep.subr.mxu0 0.0
    %1275 = vmatpush1.msra.mxu0 0.0
    %1276 = vmatprep.subr.mxu0 0.0
    %1277 = vmatpush1.msra.mxu0 0.0
    %1278 = vmatprep.subr.mxu0 0.0
    %1279 = vmatpush1.msra.mxu0 0.0
    %1280 = vmatprep.subr.mxu0 0.0
    %1281 = vmatpush1.msra.mxu0 0.0
    %1282 = vmatprep.subr.mxu0 0.0
    %1283 = vmatpush1.msra.mxu0 0.0
    %1284 = vmatprep.subr.mxu0 0.0
    %1285 = vmatpush1.msra.mxu0 0.0
    %1286 = vmatprep.subr.mxu0 0.0
    %1287 = vmatpush1.msra.mxu0 0.0
    %1288 = vmatprep.subr.mxu0 0.0
    %1289 = vmatpush1.msra.mxu0 0.0
    %1290 = vmatprep.subr.mxu0 0.0
    %1291 = vmatpush1.msra.mxu0 0.0
    %1292 = vmatprep.subr.mxu0 0.0
    %1293 = vmatpush1.msra.mxu0 0.0
    %1294 = vmatprep.subr.mxu0 0.0
    %1295 = vmatpush1.msra.mxu0 0.0
    %1296 = vmatprep.subr.mxu0 0.0
    %1297 = vmatpush1.msra.mxu0 0.0
    %1298 = vmatprep.subr.mxu0 0.0
    %1299 = vmatpush1.msra.mxu0 0.0
    %1300 = vmatprep.subr.mxu0 0.0
    %1301 = vmatpush1.msra.mxu0 0.0
    %1302 = vmatprep.subr.mxu0 0.0
    %1303 = vmatpush1.msra.mxu0 0.0
    %1304 = vmatprep.subr.mxu0 0.0
    %1305 = vmatpush1.msra.mxu0 0.0
    %1306 = vmatprep.subr.mxu0 0.0
    %1307 = vmatpush1.msra.mxu0 0.0
    %1308 = vmatprep.subr.mxu0 0.0
    %1309 = vmatpush1.msra.mxu0 0.0
    %1310 = vmatprep.subr.mxu0 0.0
    %1311 = vmatpush1.msra.mxu0 0.0
    %1312 = vmatprep.subr.mxu0 0.0
    %1313 = vmatpush1.msra.mxu0 0.0
    %1314 = vmatprep.mubr.f32.mxu0 0.0
    %v1315 = vand.u32 %v1125, 4294901760
    %1316 = vmatmul.mubr.f32.gmra.mrb[0].mxu0 %v1315
    %v1317 = vpop.f32.mrb[0].mxu0
    %v1318 = vadd.f32 %v1207, %v1317
    %v1319 = vpop.f32.mrb[0].mxu0
    %1320 = vdwg.mxu0
    %1321 = vmatprep.subr.mxu0 0.0
    %v1322 = vand.u32 %v1109, 4294901760
    %v1323 = vsub.f32 %v1109, %v1322
    %1324 = vmatpush1.msra.mxu0 %v1323
    %1325 = vmatprep.subr.mxu0 0.0
    %v1326 = vand.u32 %v1110, 4294901760
    %v1327 = vsub.f32 %v1110, %v1326
    %1328 = vmatpush1.msra.mxu0 %v1327
    %1329 = vmatprep.subr.mxu0 0.0
    %v1330 = vand.u32 %v1111, 4294901760
    %v1331 = vsub.f32 %v1111, %v1330
    %1332 = vmatpush1.msra.mxu0 %v1331
    %1333 = vmatprep.subr.mxu0 0.0
    %v1334 = vand.u32 %v1112, 4294901760
    %v1335 = vsub.f32 %v1112, %v1334
    %1336 = vmatpush1.msra.mxu0 %v1335
    %1337 = vmatprep.subr.mxu0 0.0
    %v1338 = vand.u32 %v1113, 4294901760
    %v1339 = vsub.f32 %v1113, %v1338
    %1340 = vmatpush1.msra.mxu0 %v1339
    %1341 = vmatprep.subr.mxu0 0.0
    %v1342 = vand.u32 %v1114, 4294901760
    %v1343 = vsub.f32 %v1114, %v1342
    %1344 = vmatpush1.msra.mxu0 %v1343
    %1345 = vmatprep.subr.mxu0 0.0
    %v1346 = vand.u32 %v1115, 4294901760
    %v1347 = vsub.f32 %v1115, %v1346
    %1348 = vmatpush1.msra.mxu0 %v1347
    %1349 = vmatprep.subr.mxu0 0.0
    %v1350 = vand.u32 %v1116, 4294901760
    %v1351 = vsub.f32 %v1116, %v1350
    %1352 = vmatpush1.msra.mxu0 %v1351
    %1353 = vmatprep.subr.mxu0 0.0
    %1354 = vmatpush1.msra.mxu0 0.0
    %1355 = vmatprep.subr.mxu0 0.0
    %1356 = vmatpush1.msra.mxu0 0.0
    %1357 = vmatprep.subr.mxu0 0.0
    %1358 = vmatpush1.msra.mxu0 0.0
    %1359 = vmatprep.subr.mxu0 0.0
    %1360 = vmatpush1.msra.mxu0 0.0
    %1361 = vmatprep.subr.mxu0 0.0
    %1362 = vmatpush1.msra.mxu0 0.0
    %1363 = vmatprep.subr.mxu0 0.0
    %1364 = vmatpush1.msra.mxu0 0.0
    %1365 = vmatprep.subr.mxu0 0.0
    %1366 = vmatpush1.msra.mxu0 0.0
    %1367 = vmatprep.subr.mxu0 0.0
    %1368 = vmatpush1.msra.mxu0 0.0
    %1369 = vmatprep.subr.mxu0 0.0
    %1370 = vmatpush1.msra.mxu0 0.0
    %1371 = vmatprep.subr.mxu0 0.0
    %1372 = vmatpush1.msra.mxu0 0.0
    %1373 = vmatprep.subr.mxu0 0.0
    %1374 = vmatpush1.msra.mxu0 0.0
    %1375 = vmatprep.subr.mxu0 0.0
    %1376 = vmatpush1.msra.mxu0 0.0
    %1377 = vmatprep.subr.mxu0 0.0
    %1378 = vmatpush1.msra.mxu0 0.0
    %1379 = vmatprep.subr.mxu0 0.0
    %1380 = vmatpush1.msra.mxu0 0.0
    %1381 = vmatprep.subr.mxu0 0.0
    %1382 = vmatpush1.msra.mxu0 0.0
    %1383 = vmatprep.subr.mxu0 0.0
    %1384 = vmatpush1.msra.mxu0 0.0
    %1385 = vmatprep.subr.mxu0 0.0
    %1386 = vmatpush1.msra.mxu0 0.0
    %1387 = vmatprep.subr.mxu0 0.0
    %1388 = vmatpush1.msra.mxu0 0.0
    %1389 = vmatprep.subr.mxu0 0.0
    %1390 = vmatpush1.msra.mxu0 0.0
    %1391 = vmatprep.subr.mxu0 0.0
    %1392 = vmatpush1.msra.mxu0 0.0
    %1393 = vmatprep.subr.mxu0 0.0
    %1394 = vmatpush1.msra.mxu0 0.0
    %1395 = vmatprep.subr.mxu0 0.0
    %1396 = vmatpush1.msra.mxu0 0.0
    %1397 = vmatprep.subr.mxu0 0.0
    %1398 = vmatpush1.msra.mxu0 0.0
    %1399 = vmatprep.subr.mxu0 0.0
    %1400 = vmatpush1.msra.mxu0 0.0
    %1401 = vmatprep.mubr.f32.mxu0 0.0
    %v1402 = vand.u32 %v1125, 4294901760
    %v1403 = vsub.f32 %v1125, %v1402
    %1404 = vmatmul.mubr.f32.gmra.mrb[0].mxu0 %v1403
    %v1405 = vpop.f32.mrb[0].mxu0
    %v1406 = vadd.f32 %v1318, %v1405
    %v1407 = vpop.f32.mrb[0].mxu0
    %1408 = vdwg.mxu0
    %1409 = vmatprep.subr.mxu0 0.0
    %v1410 = vand.u32 %v1109, 4294901760
    %1411 = vmatpush1.msra.mxu0 %v1410
    %1412 = vmatprep.subr.mxu0 0.0
    %v1413 = vand.u32 %v1110, 4294901760
    %1414 = vmatpush1.msra.mxu0 %v1413
    %1415 = vmatprep.subr.mxu0 0.0
    %v1416 = vand.u32 %v1111, 4294901760
    %1417 = vmatpush1.msra.mxu0 %v1416
    %1418 = vmatprep.subr.mxu0 0.0
    %v1419 = vand.u32 %v1112, 4294901760
    %1420 = vmatpush1.msra.mxu0 %v1419
    %1421 = vmatprep.subr.mxu0 0.0
    %v1422 = vand.u32 %v1113, 4294901760
    %1423 = vmatpush1.msra.mxu0 %v1422
    %1424 = vmatprep.subr.mxu0 0.0
    %v1425 = vand.u32 %v1114, 4294901760
    %1426 = vmatpush1.msra.mxu0 %v1425
    %1427 = vmatprep.subr.mxu0 0.0
    %v1428 = vand.u32 %v1115, 4294901760
    %1429 = vmatpush1.msra.mxu0 %v1428
    %1430 = vmatprep.subr.mxu0 0.0
    %v1431 = vand.u32 %v1116, 4294901760
    %1432 = vmatpush1.msra.mxu0 %v1431
    %1433 = vmatprep.subr.mxu0 0.0
    %1434 = vmatpush1.msra.mxu0 0.0
    %1435 = vmatprep.subr.mxu0 0.0
    %1436 = vmatpush1.msra.mxu0 0.0
    %1437 = vmatprep.subr.mxu0 0.0
    %1438 = vmatpush1.msra.mxu0 0.0
    %1439 = vmatprep.subr.mxu0 0.0
    %1440 = vmatpush1.msra.mxu0 0.0
    %1441 = vmatprep.subr.mxu0 0.0
    %1442 = vmatpush1.msra.mxu0 0.0
    %1443 = vmatprep.subr.mxu0 0.0
    %1444 = vmatpush1.msra.mxu0 0.0
    %1445 = vmatprep.subr.mxu0 0.0
    %1446 = vmatpush1.msra.mxu0 0.0
    %1447 = vmatprep.subr.mxu0 0.0
    %1448 = vmatpush1.msra.mxu0 0.0
    %1449 = vmatprep.subr.mxu0 0.0
    %1450 = vmatpush1.msra.mxu0 0.0
    %1451 = vmatprep.subr.mxu0 0.0
    %1452 = vmatpush1.msra.mxu0 0.0
    %1453 = vmatprep.subr.mxu0 0.0
    %1454 = vmatpush1.msra.mxu0 0.0
    %1455 = vmatprep.subr.mxu0 0.0
    %1456 = vmatpush1.msra.mxu0 0.0
    %1457 = vmatprep.subr.mxu0 0.0
    %1458 = vmatpush1.msra.mxu0 0.0
    %1459 = vmatprep.subr.mxu0 0.0
    %1460 = vmatpush1.msra.mxu0 0.0
    %1461 = vmatprep.subr.mxu0 0.0
    %1462 = vmatpush1.msra.mxu0 0.0
    %1463 = vmatprep.subr.mxu0 0.0
    %1464 = vmatpush1.msra.mxu0 0.0
    %1465 = vmatprep.subr.mxu0 0.0
    %1466 = vmatpush1.msra.mxu0 0.0
    %1467 = vmatprep.subr.mxu0 0.0
    %1468 = vmatpush1.msra.mxu0 0.0
    %1469 = vmatprep.subr.mxu0 0.0
    %1470 = vmatpush1.msra.mxu0 0.0
    %1471 = vmatprep.subr.mxu0 0.0
    %1472 = vmatpush1.msra.mxu0 0.0
    %1473 = vmatprep.subr.mxu0 0.0
    %1474 = vmatpush1.msra.mxu0 0.0
    %1475 = vmatprep.subr.mxu0 0.0
    %1476 = vmatpush1.msra.mxu0 0.0
    %1477 = vmatprep.subr.mxu0 0.0
    %1478 = vmatpush1.msra.mxu0 0.0
    %1479 = vmatprep.subr.mxu0 0.0
    %1480 = vmatpush1.msra.mxu0 0.0
    %1481 = vmatprep.mubr.f32.mxu0 0.0
    %v1482 = vand.u32 %v1125, 4294901760
    %v1483 = vsub.f32 %v1125, %v1482
    %v1484 = vand.u32 %v1483, 4294901760
    %1485 = vmatmul.mubr.f32.gmra.mrb[0].mxu0 %v1484
    %v1486 = vpop.f32.mrb[0].mxu0
    %v1487 = vadd.f32 %v1406, %v1486
    %v1488 = vpop.f32.mrb[0].mxu0
    %1489 = vdwg.mxu0
    %1490 = vmatprep.subr.mxu0 0.0
    %v1491 = vand.u32 %v1109, 4294901760
    %v1492 = vsub.f32 %v1109, %v1491
    %v1493 = vand.u32 %v1492, 4294901760
    %1494 = vmatpush1.msra.mxu0 %v1493
    %1495 = vmatprep.subr.mxu0 0.0
    %v1496 = vand.u32 %v1110, 4294901760
    %v1497 = vsub.f32 %v1110, %v1496
    %v1498 = vand.u32 %v1497, 4294901760
    %1499 = vmatpush1.msra.mxu0 %v1498
    %1500 = vmatprep.subr.mxu0 0.0
    %v1501 = vand.u32 %v1111, 4294901760
    %v1502 = vsub.f32 %v1111, %v1501
    %v1503 = vand.u32 %v1502, 4294901760
    %1504 = vmatpush1.msra.mxu0 %v1503
    %1505 = vmatprep.subr.mxu0 0.0
    %v1506 = vand.u32 %v1112, 4294901760
    %v1507 = vsub.f32 %v1112, %v1506
    %v1508 = vand.u32 %v1507, 4294901760
    %1509 = vmatpush1.msra.mxu0 %v1508
    %1510 = vmatprep.subr.mxu0 0.0
    %v1511 = vand.u32 %v1113, 4294901760
    %v1512 = vsub.f32 %v1113, %v1511
    %v1513 = vand.u32 %v1512, 4294901760
    %1514 = vmatpush1.msra.mxu0 %v1513
    %1515 = vmatprep.subr.mxu0 0.0
    %v1516 = vand.u32 %v1114, 4294901760
    %v1517 = vsub.f32 %v1114, %v1516
    %v1518 = vand.u32 %v1517, 4294901760
    %1519 = vmatpush1.msra.mxu0 %v1518
    %1520 = vmatprep.subr.mxu0 0.0
    %v1521 = vand.u32 %v1115, 4294901760
    %v1522 = vsub.f32 %v1115, %v1521
    %v1523 = vand.u32 %v1522, 4294901760
    %1524 = vmatpush1.msra.mxu0 %v1523
    %1525 = vmatprep.subr.mxu0 0.0
    %v1526 = vand.u32 %v1116, 4294901760
    %v1527 = vsub.f32 %v1116, %v1526
    %v1528 = vand.u32 %v1527, 4294901760
    %1529 = vmatpush1.msra.mxu0 %v1528
    %1530 = vmatprep.subr.mxu0 0.0
    %1531 = vmatpush1.msra.mxu0 0.0
    %1532 = vmatprep.subr.mxu0 0.0
    %1533 = vmatpush1.msra.mxu0 0.0
    %1534 = vmatprep.subr.mxu0 0.0
    %1535 = vmatpush1.msra.mxu0 0.0
    %1536 = vmatprep.subr.mxu0 0.0
    %1537 = vmatpush1.msra.mxu0 0.0
    %1538 = vmatprep.subr.mxu0 0.0
    %1539 = vmatpush1.msra.mxu0 0.0
    %1540 = vmatprep.subr.mxu0 0.0
    %1541 = vmatpush1.msra.mxu0 0.0
    %1542 = vmatprep.subr.mxu0 0.0
    %1543 = vmatpush1.msra.mxu0 0.0
    %1544 = vmatprep.subr.mxu0 0.0
    %1545 = vmatpush1.msra.mxu0 0.0
    %1546 = vmatprep.subr.mxu0 0.0
    %1547 = vmatpush1.msra.mxu0 0.0
    %1548 = vmatprep.subr.mxu0 0.0
    %1549 = vmatpush1.msra.mxu0 0.0
    %1550 = vmatprep.subr.mxu0 0.0
    %1551 = vmatpush1.msra.mxu0 0.0
    %1552 = vmatprep.subr.mxu0 0.0
    %1553 = vmatpush1.msra.mxu0 0.0
    %1554 = vmatprep.subr.mxu0 0.0
    %1555 = vmatpush1.msra.mxu0 0.0
    %1556 = vmatprep.subr.mxu0 0.0
    %1557 = vmatpush1.msra.mxu0 0.0
    %1558 = vmatprep.subr.mxu0 0.0
    %1559 = vmatpush1.msra.mxu0 0.0
    %1560 = vmatprep.subr.mxu0 0.0
    %1561 = vmatpush1.msra.mxu0 0.0
    %1562 = vmatprep.subr.mxu0 0.0
    %1563 = vmatpush1.msra.mxu0 0.0
    %1564 = vmatprep.subr.mxu0 0.0
    %1565 = vmatpush1.msra.mxu0 0.0
    %1566 = vmatprep.subr.mxu0 0.0
    %1567 = vmatpush1.msra.mxu0 0.0
    %1568 = vmatprep.subr.mxu0 0.0
    %1569 = vmatpush1.msra.mxu0 0.0
    %1570 = vmatprep.subr.mxu0 0.0
    %1571 = vmatpush1.msra.mxu0 0.0
    %1572 = vmatprep.subr.mxu0 0.0
    %1573 = vmatpush1.msra.mxu0 0.0
    %1574 = vmatprep.subr.mxu0 0.0
    %1575 = vmatpush1.msra.mxu0 0.0
    %1576 = vmatprep.subr.mxu0 0.0
    %1577 = vmatpush1.msra.mxu0 0.0
    %1578 = vmatprep.mubr.f32.mxu0 0.0
    %v1579 = vand.u32 %v1125, 4294901760
    %1580 = vmatmul.mubr.f32.gmra.mrb[0].mxu0 %v1579
    %v1581 = vpop.f32.mrb[0].mxu0
    %v1582 = vadd.f32 %v1487, %v1581
    %v1583 = vpop.f32.mrb[0].mxu0
    %1584 = vdwg.mxu0
    %1585 = vmatprep.subr.mxu0 0.0
    %v1586 = vand.u32 %v1109, 4294901760
    %1587 = vmatpush1.msra.mxu0 %v1586
    %1588 = vmatprep.subr.mxu0 0.0
    %v1589 = vand.u32 %v1110, 4294901760
    %1590 = vmatpush1.msra.mxu0 %v1589
    %1591 = vmatprep.subr.mxu0 0.0
    %v1592 = vand.u32 %v1111, 4294901760
    %1593 = vmatpush1.msra.mxu0 %v1592
    %1594 = vmatprep.subr.mxu0 0.0
    %v1595 = vand.u32 %v1112, 4294901760
    %1596 = vmatpush1.msra.mxu0 %v1595
    %1597 = vmatprep.subr.mxu0 0.0
    %v1598 = vand.u32 %v1113, 4294901760
    %1599 = vmatpush1.msra.mxu0 %v1598
    %1600 = vmatprep.subr.mxu0 0.0
    %v1601 = vand.u32 %v1114, 4294901760
    %1602 = vmatpush1.msra.mxu0 %v1601
    %1603 = vmatprep.subr.mxu0 0.0
    %v1604 = vand.u32 %v1115, 4294901760
    %1605 = vmatpush1.msra.mxu0 %v1604
    %1606 = vmatprep.subr.mxu0 0.0
    %v1607 = vand.u32 %v1116, 4294901760
    %1608 = vmatpush1.msra.mxu0 %v1607
    %1609 = vmatprep.subr.mxu0 0.0
    %1610 = vmatpush1.msra.mxu0 0.0
    %1611 = vmatprep.subr.mxu0 0.0
    %1612 = vmatpush1.msra.mxu0 0.0
    %1613 = vmatprep.subr.mxu0 0.0
    %1614 = vmatpush1.msra.mxu0 0.0
    %1615 = vmatprep.subr.mxu0 0.0
    %1616 = vmatpush1.msra.mxu0 0.0
    %1617 = vmatprep.subr.mxu0 0.0
    %1618 = vmatpush1.msra.mxu0 0.0
    %1619 = vmatprep.subr.mxu0 0.0
    %1620 = vmatpush1.msra.mxu0 0.0
    %1621 = vmatprep.subr.mxu0 0.0
    %1622 = vmatpush1.msra.mxu0 0.0
    %1623 = vmatprep.subr.mxu0 0.0
    %1624 = vmatpush1.msra.mxu0 0.0
    %1625 = vmatprep.subr.mxu0 0.0
    %1626 = vmatpush1.msra.mxu0 0.0
    %1627 = vmatprep.subr.mxu0 0.0
    %1628 = vmatpush1.msra.mxu0 0.0
    %1629 = vmatprep.subr.mxu0 0.0
    %1630 = vmatpush1.msra.mxu0 0.0
    %1631 = vmatprep.subr.mxu0 0.0
    %1632 = vmatpush1.msra.mxu0 0.0
    %1633 = vmatprep.subr.mxu0 0.0
    %1634 = vmatpush1.msra.mxu0 0.0
    %1635 = vmatprep.subr.mxu0 0.0
    %1636 = vmatpush1.msra.mxu0 0.0
    %1637 = vmatprep.subr.mxu0 0.0
    %1638 = vmatpush1.msra.mxu0 0.0
    %1639 = vmatprep.subr.mxu0 0.0
    %1640 = vmatpush1.msra.mxu0 0.0
    %1641 = vmatprep.subr.mxu0 0.0
    %1642 = vmatpush1.msra.mxu0 0.0
    %1643 = vmatprep.subr.mxu0 0.0
    %1644 = vmatpush1.msra.mxu0 0.0
    %1645 = vmatprep.subr.mxu0 0.0
    %1646 = vmatpush1.msra.mxu0 0.0
    %1647 = vmatprep.subr.mxu0 0.0
    %1648 = vmatpush1.msra.mxu0 0.0
    %1649 = vmatprep.subr.mxu0 0.0
    %1650 = vmatpush1.msra.mxu0 0.0
    %1651 = vmatprep.subr.mxu0 0.0
    %1652 = vmatpush1.msra.mxu0 0.0
    %1653 = vmatprep.subr.mxu0 0.0
    %1654 = vmatpush1.msra.mxu0 0.0
    %1655 = vmatprep.subr.mxu0 0.0
    %1656 = vmatpush1.msra.mxu0 0.0
    %1657 = vmatprep.mubr.f32.mxu0 0.0
    %v1658 = vand.u32 %v1125, 4294901760
    %1659 = vmatmul.mubr.f32.gmra.mrb[0].mxu0 %v1658
    %v1660 = vpop.f32.mrb[0].mxu0
    %v1661 = vadd.f32 %v1582, %v1660
    %v1662 = vpop.f32.mrb[0].mxu0
    %1663 = vdwg.mxu0
    %v1664 = vld [vmem:[%s1] sm:$0xff]
    %v1665 = vsub.f32 %v1664, %v1661
    %v1666 = vld [vmem:[%s8] sm:$0x1]
    %v1668 = vlaneseq
    %v1669 = vshrl.u32 %v1668, 7
    %v1670 = vsub.s32 0, %v1669
    %v1671 = vrot.slane %v1666, %v1670
    %v1673 = vmul.f32 %v1665, %v1671
    %v1674 = vmul.f32 %v1673, -0.5
    %v1675 = vmul.f32 %v1674, %v1673
    %v1676 = vld [vmem:[%s9] sm:$0x1]
    %v1678 = vlaneseq
    %v1679 = vshrl.u32 %v1678, 7
    %v1680 = vsub.s32 0, %v1679
    %v1681 = vrot.slane %v1676, %v1680
    %v1683 = vadd.f32 %v1675, %v1681
    %vm1684 = vcmask 130048
    %1685 = vst.msk [vmem:[#allocation5] sm:$0xff] %vm1684, %v1683
    // Predicated region
    $region46: #{tpu_custom_call.1} parent=1 // pred_check
      _
    $region47: #{tpu_custom_call.1} parent=1 // pred_check_branch
      %1687 = sbr.rel (0) target = $region49
    $region48: #{tpu_custom_call.1} parent=1 // pred_region
      %s1689 = ssub.s32 128, 128
      %1690 = vsyncadd [#allocation4], %s1689
      %s1692 = sshll.u32 [#allocation5], 4
      %s1693 = int_to_ptr.vmem [resolvable:$true] %s1692
      %1695 = dma.vmem_to_hbm [thread:$0]  %s1693, 128, %s10, [#allocation4]
    $region49: #{tpu_custom_call.1} parent=1 // pred_fallthru
      _
    // Predicated region
    $region50: #{tpu_custom_call.1} parent=1 // pred_check
      _
    $region51: #{tpu_custom_call.1} parent=1 // pred_check_branch
      %1697 = sbr.rel (0) target = $region53
    $region52: #{tpu_custom_call.1} parent=1 // pred_region
      %1698 = dma.done [#allocation4], 128
    $region53: #{tpu_custom_call.1} parent=1 // pred_fallthru
      _
    %1699 = vsyncpa [#allocation3], 1
    %1700 = vsyncpa [#allocation4], 1

</llo_original>
